<compile_context>
chip_gen: v5e
topology: v5e:2x2
jax: 0.10.0
libtpu: 0.0.40
codegen_flags: <defaults>
</compile_context>

<pallas_src>
import jax
import jax.numpy as jnp
import numpy as np
from jax.experimental import pallas as pl
from jax.experimental.pallas import tpu as pltpu

_EPS = 1e-5


# ----------------------------------------------------------------------------
# Fused kernel
# ----------------------------------------------------------------------------
def _im2col_3x3(xp, rows, cols, c):
    """xp: (rows+2, cols+2, c) zero-padded tile -> (rows*cols, 9*c) patch slab.

    Column order is (kh, kw, cin) with cin fastest, matching _repack_weight.
    """
    taps = []
    for kh in range(3):
        for kw in range(3):
            taps.append(xp[kh:kh + rows, kw:kw + cols, :])
    slab = jnp.concatenate(taps, axis=-1)              # (rows, cols, 9c)
    return slab.reshape(rows * cols, 9 * c)


def basic_block_kernel(x_ref, w1_ref, w2_ref, s1_ref, b1_ref, s2_ref, b2_ref,
                       out_ref):
    """One (batch n, row-stripe h) step of the fused BasicBlock."""
    _, tH, W, C = out_ref.shape                        # static block shape
    H = x_ref.shape[1]
    h = pl.program_id(1)
    nH = pl.num_programs(1)
    r0 = pl.multiple_of(h * tH, tH)                    # first output row

    # --- x rows [r0-2, r0+tH+2) with zero H-halo; zero-pad W by 1 (in VMEM) --
    ctr = x_ref[0, pl.ds(r0, tH), :, :]                # (tH,W,C) f32, residual
    top = x_ref[0, pl.ds(jnp.maximum(r0 - 2, 0), 2), :, :] * \
        (h > 0).astype(jnp.float32)
    bot = x_ref[0, pl.ds(jnp.minimum(r0 + tH, H - 2), 2), :, :] * \
        (h + 1 < nH).astype(jnp.float32)
    xband = jnp.concatenate([top.astype(jnp.bfloat16),
                             ctr.astype(jnp.bfloat16),
                             bot.astype(jnp.bfloat16)], axis=0)   # (tH+4,W,C)
    zc = jnp.zeros((tH + 4, 1, C), jnp.bfloat16)
    xpad = jnp.concatenate([zc, xband, zc], axis=1)               # (tH+4,W+2,C)

    # --- conv1 + bn1 + relu on a (tH+2)-row band (1-row halo for conv2) -----
    slab1 = _im2col_3x3(xpad, tH + 2, W, C)            # ((tH+2)*W, 9C) bf16
    acc1 = jnp.dot(slab1, w1_ref[...], preferred_element_type=jnp.float32)
    y1 = jnp.maximum(acc1 * s1_ref[...] + b1_ref[...], 0.0)
    y1 = y1.reshape(tH + 2, W, C)
    # Halo rows outside the image are conv2's ZERO padding (not conv1 output).
    gr = jax.lax.broadcasted_iota(jnp.int32, (tH + 2, 1, 1), 0) + (r0 - 1)
    row_ok = jnp.logical_and(gr >= 0, gr < H).astype(jnp.float32)
    y1 = (y1 * row_ok).astype(jnp.bfloat16)
    zc1 = jnp.zeros((tH + 2, 1, C), jnp.bfloat16)
    y1p = jnp.concatenate([zc1, y1, zc1], axis=1)      # (tH+2, W+2, C)

    # --- conv2 + bn2 + residual add + relu -----------------------------------
    slab2 = _im2col_3x3(y1p, tH, W, C)                 # (tH*W, 9C) bf16
    acc2 = jnp.dot(slab2, w2_ref[...], preferred_element_type=jnp.float32)
    y2 = acc2 * s2_ref[...] + b2_ref[...]
    y2 = y2.reshape(tH, W, C) + ctr                    # residual in f32
    out_ref[0] = jnp.maximum(y2, 0.0).astype(out_ref.dtype)


# ----------------------------------------------------------------------------
# pallas_call wrapper
# ----------------------------------------------------------------------------
def _pick_tile_h(H, target=8):
    """Largest divisor of H in [2, target] (>=2 keeps the 2-row halo legal);
    fall back to a single full-height stripe."""
    cands = [d for d in range(2, target + 1) if d <= H and H % d == 0]
    return max(cands) if cands else H


def _fold_bn(gamma, beta, mean, var):
    scale = gamma / jnp.sqrt(var + _EPS)
    bias = beta - mean * scale
    return (scale.reshape(1, -1).astype(jnp.float32),
            bias.reshape(1, -1).astype(jnp.float32))


def _repack_weight(w_oihw):
    # (Cout, Cin, 3, 3) -> (3, 3, Cin, Cout) -> (9*Cin, Cout), bf16 for the MXU
    cout, cin = w_oihw.shape[0], w_oihw.shape[1]
    return (jnp.transpose(w_oihw, (2, 3, 1, 0))
            .reshape(9 * cin, cout).astype(jnp.bfloat16))


def _fused_basic_block(x_nhwc, w1, w2, s1, b1, s2, b2, tile_h):
    N, H, W, C = x_nhwc.shape
    nH = H // tile_h
    kC = w1.shape[0]                                   # 9 * C

    flops = 2 * (2 * N * H * W * kC * C)               # two 3x3 convs
    bytes_accessed = (2 * N * H * W * C) * 4 + (w1.size + w2.size) * 2 \
        + (s1.size + b1.size + s2.size + b2.size) * 4

    return pl.pallas_call(
        basic_block_kernel,
        out_shape=jax.ShapeDtypeStruct((N, H, W, C), jnp.float32),
        grid=(N, nH),
        in_specs=[
            # x: full image per batch element, resident across the stripe axis
            # (block index constant in h => DMA'd once per n); doubles as the
            # residual, so no second HBM read of x.
            pl.BlockSpec((1, H, W, C), lambda n, h: (n, 0, 0, 0)),
            pl.BlockSpec((kC, C), lambda n, h: (0, 0)),
            pl.BlockSpec((kC, C), lambda n, h: (0, 0)),
            pl.BlockSpec((1, C), lambda n, h: (0, 0)),
            pl.BlockSpec((1, C), lambda n, h: (0, 0)),
            pl.BlockSpec((1, C), lambda n, h: (0, 0)),
            pl.BlockSpec((1, C), lambda n, h: (0, 0)),
        ],
        out_specs=pl.BlockSpec((1, tile_h, W, C), lambda n, h: (n, h, 0, 0)),
        compiler_params=pltpu.CompilerParams(
            dimension_semantics=("parallel", "parallel")),
        cost_estimate=pl.CostEstimate(flops=flops, transcendentals=0,
                                      bytes_accessed=bytes_accessed),
    )(x_nhwc, w1, w2, s1, b1, s2, b2)


@jax.jit
def basic_block_forward(x_nchw, params):
    x = jnp.transpose(x_nchw, (0, 2, 3, 1)).astype(jnp.float32)   # NHWC
    _, H, _, _ = x.shape
    tile_h = _pick_tile_h(H)
    w1 = _repack_weight(params["conv1_w"])
    w2 = _repack_weight(params["conv2_w"])
    s1, b1 = _fold_bn(params["bn1_gamma"], params["bn1_beta"],
                      params["bn1_mean"], params["bn1_var"])
    s2, b2 = _fold_bn(params["bn2_gamma"], params["bn2_beta"],
                      params["bn2_mean"], params["bn2_var"])
    out = _fused_basic_block(x, w1, w2, s1, b1, s2, b2, tile_h)
    return jnp.transpose(out, (0, 3, 1, 2))                       # NCHW


# ----------------------------------------------------------------------------
# Pure-JAX reference (mirrors the PyTorch forward exactly, f32 everywhere)
# ----------------------------------------------------------------------------
def reference_forward(x, params):
    def conv(x, w):
        return jax.lax.conv_general_dilated(
            x, w, window_strides=(1, 1), padding=((1, 1), (1, 1)),
            dimension_numbers=("NCHW", "OIHW", "NCHW"))

    def bn(x, g, b, m, v):
        g, b, m, v = (t[None, :, None, None] for t in (g, b, m, v))
        return (x - m) / jnp.sqrt(v + _EPS) * g + b

    out = conv(x, params["conv1_w"])
    out = bn(out, params["bn1_gamma"], params["bn1_beta"],
             params["bn1_mean"], params["bn1_var"])
    out = jnp.maximum(out, 0.0)
    out = conv(out, params["conv2_w"])
    out = bn(out, params["bn2_gamma"], params["bn2_beta"],
             params["bn2_mean"], params["bn2_var"])
    out = out + x
    return jnp.maximum(out, 0.0)


# ----------------------------------------------------------------------------
if __name__ == "__main__":
    N, C, H, W = 2, 4, 16, 16       # inplanes == planes == 4, stride=1
    key = jax.random.PRNGKey(0)
    keys = jax.random.split(key, 11)

    params = {
        "conv1_w": 0.1 * jax.random.normal(keys[0], (C, C, 3, 3), jnp.float32),
        "conv2_w": 0.1 * jax.random.normal(keys[1], (C, C, 3, 3), jnp.float32),
        "bn1_gamma": 1.0 + 0.1 * jax.random.normal(keys[2], (C,), jnp.float32),
        "bn1_beta": 0.1 * jax.random.normal(keys[3], (C,), jnp.float32),
        "bn1_mean": 0.1 * jax.random.normal(keys[4], (C,), jnp.float32),
        "bn1_var": jnp.abs(jax.random.normal(keys[5], (C,), jnp.float32)) + 0.5,
        "bn2_gamma": 1.0 + 0.1 * jax.random.normal(keys[6], (C,), jnp.float32),
        "bn2_beta": 0.1 * jax.random.normal(keys[7], (C,), jnp.float32),
        "bn2_mean": 0.1 * jax.random.normal(keys[8], (C,), jnp.float32),
        "bn2_var": jnp.abs(jax.random.normal(keys[9], (C,), jnp.float32)) + 0.5,
    }
    x = jax.random.normal(keys[10], (N, C, H, W), jnp.float32)

    out = jax.block_until_ready(basic_block_forward(x, params))
    ref = reference_forward(x, params)
    # bf16 MXU operands (f32 accumulation) => tolerance looser than pure f32.
    np.testing.assert_allclose(np.asarray(out), np.asarray(ref),
                               rtol=5e-2, atol=5e-2)
    print("KERNEL_OK")
</pallas_src>

<mosaic_0001>
module attributes {stable_mosaic.version = 11 : i64} {
  func.func @basic_block_kernel(%arg0: i32, %arg1: i32, %arg2: memref<1x16x16x4xf32, #tpu.memory_space<vmem>>, %arg3: memref<36x4xbf16, #tpu.memory_space<vmem>>, %arg4: memref<36x4xbf16, #tpu.memory_space<vmem>>, %arg5: memref<1x4xf32, #tpu.memory_space<vmem>>, %arg6: memref<1x4xf32, #tpu.memory_space<vmem>>, %arg7: memref<1x4xf32, #tpu.memory_space<vmem>>, %arg8: memref<1x4xf32, #tpu.memory_space<vmem>>, %arg9: memref<1x8x16x4xf32, #tpu.memory_space<vmem>>) attributes {dimension_semantics = [#tpu.dimension_semantics<parallel>, #tpu.dimension_semantics<parallel>], iteration_bounds = array<i64: 2, 2>, scalar_prefetch = 0 : i64, scratch_operands = 0 : i64, tpu.core_type = #tpu.core_type<tc>, window_params = [{transform_indices = @transform_0, window_bounds = array<i64: 1, 16, 16, 4>}, {pipeline_mode = #tpu.pipeline_mode<synchronous>, transform_indices = @transform_1, window_bounds = array<i64: 36, 4>}, {pipeline_mode = #tpu.pipeline_mode<synchronous>, transform_indices = @transform_2, window_bounds = array<i64: 36, 4>}, {pipeline_mode = #tpu.pipeline_mode<synchronous>, transform_indices = @transform_3, window_bounds = array<i64: 1, 4>}, {pipeline_mode = #tpu.pipeline_mode<synchronous>, transform_indices = @transform_4, window_bounds = array<i64: 1, 4>}, {pipeline_mode = #tpu.pipeline_mode<synchronous>, transform_indices = @transform_5, window_bounds = array<i64: 1, 4>}, {pipeline_mode = #tpu.pipeline_mode<synchronous>, transform_indices = @transform_6, window_bounds = array<i64: 1, 4>}, {transform_indices = @transform_7, window_bounds = array<i64: 1, 8, 16, 4>}]} {
    %c8_i32 = arith.constant 8 : i32
    %0 = arith.muli %arg1, %c8_i32 : i32
    %1 = tpu.assume_multiple %0, 8 : i32
    %c0 = arith.constant 0 : index
    %2 = arith.index_cast %1 : i32 to index
    %c0_0 = arith.constant 0 : index
    %c0_1 = arith.constant 0 : index
    %3 = vector.load %arg2[%c0, %2, %c0_0, %c0_1] : memref<1x16x16x4xf32, #tpu.memory_space<vmem>>, vector<1x8x16x4xf32>
    %4 = vector.shape_cast %3 : vector<1x8x16x4xf32> to vector<8x16x4xf32>
    %c2_i32 = arith.constant 2 : i32
    %5 = arith.subi %1, %c2_i32 : i32
    %c0_i32 = arith.constant 0 : i32
    %6 = arith.maxsi %5, %c0_i32 : i32
    %c0_2 = arith.constant 0 : index
    %7 = arith.index_cast %6 : i32 to index
    %c0_3 = arith.constant 0 : index
    %c0_4 = arith.constant 0 : index
    %8 = vector.load %arg2[%c0_2, %7, %c0_3, %c0_4] : memref<1x16x16x4xf32, #tpu.memory_space<vmem>>, vector<1x2x16x4xf32>
    %9 = vector.shape_cast %8 : vector<1x2x16x4xf32> to vector<2x16x4xf32>
    %c0_i32_5 = arith.constant 0 : i32
    %10 = arith.cmpi sgt, %arg1, %c0_i32_5 : i32
    %11 = arith.extui %10 : i1 to i32
    %12 = arith.sitofp %11 : i32 to f32
    %13 = vector.broadcast %12 : f32 to vector<2x16x4xf32>
    %14 = arith.mulf %9, %13 : vector<2x16x4xf32>
    %c8_i32_6 = arith.constant 8 : i32
    %15 = arith.addi %1, %c8_i32_6 : i32
    %c14_i32 = arith.constant 14 : i32
    %16 = arith.minsi %15, %c14_i32 : i32
    %c0_7 = arith.constant 0 : index
    %17 = arith.index_cast %16 : i32 to index
    %c0_8 = arith.constant 0 : index
    %c0_9 = arith.constant 0 : index
    %18 = vector.load %arg2[%c0_7, %17, %c0_8, %c0_9] : memref<1x16x16x4xf32, #tpu.memory_space<vmem>>, vector<1x2x16x4xf32>
    %19 = vector.shape_cast %18 : vector<1x2x16x4xf32> to vector<2x16x4xf32>
    %c1_i32 = arith.constant 1 : i32
    %20 = arith.addi %arg1, %c1_i32 : i32
    %c2_i32_10 = arith.constant 2 : i32
    %21 = arith.cmpi slt, %20, %c2_i32_10 : i32
    %22 = arith.extui %21 : i1 to i32
    %23 = arith.sitofp %22 : i32 to f32
    %24 = vector.broadcast %23 : f32 to vector<2x16x4xf32>
    %25 = arith.mulf %19, %24 : vector<2x16x4xf32>
    %26 = arith.truncf %14 : vector<2x16x4xf32> to vector<2x16x4xbf16>
    %27 = arith.truncf %4 : vector<8x16x4xf32> to vector<8x16x4xbf16>
    %28 = arith.truncf %25 : vector<2x16x4xf32> to vector<2x16x4xbf16>
    %29 = tpu.concatenate %26, %27, %28 in 0 : vector<2x16x4xbf16>, vector<8x16x4xbf16>, vector<2x16x4xbf16> -> vector<12x16x4xbf16>
    %cst = arith.constant 0.000000e+00 : bf16
    %30 = vector.broadcast %cst : bf16 to vector<12x1x4xbf16>
    %31 = tpu.concatenate %30, %29, %30 in 1 : vector<12x1x4xbf16>, vector<12x16x4xbf16>, vector<12x1x4xbf16> -> vector<12x18x4xbf16>
    %32 = vector.extract_strided_slice %31 {offsets = [0, 0, 0], sizes = [10, 16, 4], strides = [1, 1, 1]} : vector<12x18x4xbf16> to vector<10x16x4xbf16>
    %33 = vector.extract_strided_slice %31 {offsets = [0, 1, 0], sizes = [10, 16, 4], strides = [1, 1, 1]} : vector<12x18x4xbf16> to vector<10x16x4xbf16>
    %34 = vector.extract_strided_slice %31 {offsets = [0, 2, 0], sizes = [10, 16, 4], strides = [1, 1, 1]} : vector<12x18x4xbf16> to vector<10x16x4xbf16>
    %35 = vector.extract_strided_slice %31 {offsets = [1, 0, 0], sizes = [10, 16, 4], strides = [1, 1, 1]} : vector<12x18x4xbf16> to vector<10x16x4xbf16>
    %36 = vector.extract_strided_slice %31 {offsets = [1, 1, 0], sizes = [10, 16, 4], strides = [1, 1, 1]} : vector<12x18x4xbf16> to vector<10x16x4xbf16>
    %37 = vector.extract_strided_slice %31 {offsets = [1, 2, 0], sizes = [10, 16, 4], strides = [1, 1, 1]} : vector<12x18x4xbf16> to vector<10x16x4xbf16>
    %38 = vector.extract_strided_slice %31 {offsets = [2, 0, 0], sizes = [10, 16, 4], strides = [1, 1, 1]} : vector<12x18x4xbf16> to vector<10x16x4xbf16>
    %39 = vector.extract_strided_slice %31 {offsets = [2, 1, 0], sizes = [10, 16, 4], strides = [1, 1, 1]} : vector<12x18x4xbf16> to vector<10x16x4xbf16>
    %40 = vector.extract_strided_slice %31 {offsets = [2, 2, 0], sizes = [10, 16, 4], strides = [1, 1, 1]} : vector<12x18x4xbf16> to vector<10x16x4xbf16>
    %41 = tpu.concatenate %32, %33, %34, %35, %36, %37, %38, %39, %40 in 2 : vector<10x16x4xbf16>, vector<10x16x4xbf16>, vector<10x16x4xbf16>, vector<10x16x4xbf16>, vector<10x16x4xbf16>, vector<10x16x4xbf16>, vector<10x16x4xbf16>, vector<10x16x4xbf16>, vector<10x16x4xbf16> -> vector<10x16x36xbf16>
    %42 = vector.shape_cast %41 : vector<10x16x36xbf16> to vector<160x36xbf16>
    %c0_11 = arith.constant 0 : index
    %c0_12 = arith.constant 0 : index
    %43 = vector.load %arg3[%c0_11, %c0_12] : memref<36x4xbf16, #tpu.memory_space<vmem>>, vector<36x4xbf16>
    %cst_13 = arith.constant dense<0.000000e+00> : vector<160x4xf32>
    %44 = tpu.matmul %42, %43, %cst_13 {dimension_numbers = #tpu.dot_dimension_numbers<[1], [0], [0], [1], [0, 0, 1, 1], [], []>} : vector<160x36xbf16>, vector<36x4xbf16>, vector<160x4xf32> -> vector<160x4xf32>
    %c0_14 = arith.constant 0 : index
    %c0_15 = arith.constant 0 : index
    %45 = vector.load %arg5[%c0_14, %c0_15] : memref<1x4xf32, #tpu.memory_space<vmem>>, vector<1x4xf32>
    %46 = vector.broadcast %45 : vector<1x4xf32> to vector<160x4xf32>
    %47 = arith.mulf %44, %46 : vector<160x4xf32>
    %c0_16 = arith.constant 0 : index
    %c0_17 = arith.constant 0 : index
    %48 = vector.load %arg6[%c0_16, %c0_17] : memref<1x4xf32, #tpu.memory_space<vmem>>, vector<1x4xf32>
    %49 = vector.broadcast %48 : vector<1x4xf32> to vector<160x4xf32>
    %50 = arith.addf %47, %49 : vector<160x4xf32>
    %cst_18 = arith.constant 0.000000e+00 : f32
    %51 = vector.broadcast %cst_18 : f32 to vector<160x4xf32>
    %52 = arith.maximumf %50, %51 : vector<160x4xf32>
    %53 = vector.shape_cast %52 : vector<160x4xf32> to vector<10x16x4xf32>
    %54 = tpu.iota {dimensions = array<i32: 0>} : vector<10x1x1xi32>
    %c1_i32_19 = arith.constant 1 : i32
    %55 = arith.subi %1, %c1_i32_19 : i32
    %56 = vector.broadcast %55 : i32 to vector<10x1x1xi32>
    %57 = arith.addi %54, %56 : vector<10x1x1xi32>
    %c0_i32_20 = arith.constant 0 : i32
    %58 = vector.broadcast %c0_i32_20 : i32 to vector<10x1x1xi32>
    %59 = arith.cmpi sge, %57, %58 : vector<10x1x1xi32>
    %c16_i32 = arith.constant 16 : i32
    %60 = vector.broadcast %c16_i32 : i32 to vector<10x1x1xi32>
    %61 = arith.cmpi slt, %57, %60 : vector<10x1x1xi32>
    %62 = arith.andi %59, %61 : vector<10x1x1xi1>
    %63 = arith.extui %62 : vector<10x1x1xi1> to vector<10x1x1xi32>
    %64 = arith.sitofp %63 : vector<10x1x1xi32> to vector<10x1x1xf32>
    %65 = vector.broadcast %64 : vector<10x1x1xf32> to vector<10x16x4xf32>
    %66 = arith.mulf %53, %65 : vector<10x16x4xf32>
    %67 = arith.truncf %66 : vector<10x16x4xf32> to vector<10x16x4xbf16>
    %cst_21 = arith.constant 0.000000e+00 : bf16
    %68 = vector.broadcast %cst_21 : bf16 to vector<10x1x4xbf16>
    %69 = tpu.concatenate %68, %67, %68 in 1 : vector<10x1x4xbf16>, vector<10x16x4xbf16>, vector<10x1x4xbf16> -> vector<10x18x4xbf16>
    %70 = vector.extract_strided_slice %69 {offsets = [0, 0, 0], sizes = [8, 16, 4], strides = [1, 1, 1]} : vector<10x18x4xbf16> to vector<8x16x4xbf16>
    %71 = vector.extract_strided_slice %69 {offsets = [0, 1, 0], sizes = [8, 16, 4], strides = [1, 1, 1]} : vector<10x18x4xbf16> to vector<8x16x4xbf16>
    %72 = vector.extract_strided_slice %69 {offsets = [0, 2, 0], sizes = [8, 16, 4], strides = [1, 1, 1]} : vector<10x18x4xbf16> to vector<8x16x4xbf16>
    %73 = vector.extract_strided_slice %69 {offsets = [1, 0, 0], sizes = [8, 16, 4], strides = [1, 1, 1]} : vector<10x18x4xbf16> to vector<8x16x4xbf16>
    %74 = vector.extract_strided_slice %69 {offsets = [1, 1, 0], sizes = [8, 16, 4], strides = [1, 1, 1]} : vector<10x18x4xbf16> to vector<8x16x4xbf16>
    %75 = vector.extract_strided_slice %69 {offsets = [1, 2, 0], sizes = [8, 16, 4], strides = [1, 1, 1]} : vector<10x18x4xbf16> to vector<8x16x4xbf16>
    %76 = vector.extract_strided_slice %69 {offsets = [2, 0, 0], sizes = [8, 16, 4], strides = [1, 1, 1]} : vector<10x18x4xbf16> to vector<8x16x4xbf16>
    %77 = vector.extract_strided_slice %69 {offsets = [2, 1, 0], sizes = [8, 16, 4], strides = [1, 1, 1]} : vector<10x18x4xbf16> to vector<8x16x4xbf16>
    %78 = vector.extract_strided_slice %69 {offsets = [2, 2, 0], sizes = [8, 16, 4], strides = [1, 1, 1]} : vector<10x18x4xbf16> to vector<8x16x4xbf16>
    %79 = tpu.concatenate %70, %71, %72, %73, %74, %75, %76, %77, %78 in 2 : vector<8x16x4xbf16>, vector<8x16x4xbf16>, vector<8x16x4xbf16>, vector<8x16x4xbf16>, vector<8x16x4xbf16>, vector<8x16x4xbf16>, vector<8x16x4xbf16>, vector<8x16x4xbf16>, vector<8x16x4xbf16> -> vector<8x16x36xbf16>
    %80 = vector.shape_cast %79 : vector<8x16x36xbf16> to vector<128x36xbf16>
    %c0_22 = arith.constant 0 : index
    %c0_23 = arith.constant 0 : index
    %81 = vector.load %arg4[%c0_22, %c0_23] : memref<36x4xbf16, #tpu.memory_space<vmem>>, vector<36x4xbf16>
    %cst_24 = arith.constant dense<0.000000e+00> : vector<128x4xf32>
    %82 = tpu.matmul %80, %81, %cst_24 {dimension_numbers = #tpu.dot_dimension_numbers<[1], [0], [0], [1], [0, 0, 1, 1], [], []>} : vector<128x36xbf16>, vector<36x4xbf16>, vector<128x4xf32> -> vector<128x4xf32>
    %c0_25 = arith.constant 0 : index
    %c0_26 = arith.constant 0 : index
    %83 = vector.load %arg7[%c0_25, %c0_26] : memref<1x4xf32, #tpu.memory_space<vmem>>, vector<1x4xf32>
    %84 = vector.broadcast %83 : vector<1x4xf32> to vector<128x4xf32>
    %85 = arith.mulf %82, %84 : vector<128x4xf32>
    %c0_27 = arith.constant 0 : index
    %c0_28 = arith.constant 0 : index
    %86 = vector.load %arg8[%c0_27, %c0_28] : memref<1x4xf32, #tpu.memory_space<vmem>>, vector<1x4xf32>
    %87 = vector.broadcast %86 : vector<1x4xf32> to vector<128x4xf32>
    %88 = arith.addf %85, %87 : vector<128x4xf32>
    %89 = vector.shape_cast %88 : vector<128x4xf32> to vector<8x16x4xf32>
    %90 = arith.addf %89, %4 : vector<8x16x4xf32>
    %cst_29 = arith.constant 0.000000e+00 : f32
    %91 = vector.broadcast %cst_29 : f32 to vector<8x16x4xf32>
    %92 = arith.maximumf %90, %91 : vector<8x16x4xf32>
    %c0_30 = arith.constant 0 : index
    %c0_31 = arith.constant 0 : index
    %c0_32 = arith.constant 0 : index
    %c0_33 = arith.constant 0 : index
    %93 = vector.load %arg9[%c0_30, %c0_31, %c0_32, %c0_33] : memref<1x8x16x4xf32, #tpu.memory_space<vmem>>, vector<1x8x16x4xf32>
    %94 = vector.shape_cast %93 : vector<1x8x16x4xf32> to vector<8x16x4xf32>
    %95 = vector.shape_cast %92 : vector<8x16x4xf32> to vector<1x8x16x4xf32>
    tpu.vector_store %arg9[%c0_30, %c0_31, %c0_32, %c0_33], %95 {strides = array<i32>} : memref<1x8x16x4xf32, #tpu.memory_space<vmem>>, vector<1x8x16x4xf32>,
    return
  }
  func.func @transform_0(%arg0: i32, %arg1: i32) -> (i32, i32, i32, i32) {
    %c0_i32 = arith.constant 0 : i32
    %c0_i32_0 = arith.constant 0 : i32
    %c0_i32_1 = arith.constant 0 : i32
    %c0_i32_2 = arith.constant 0 : i32
    return %arg0, %c0_i32, %c0_i32_0, %c0_i32_1 : i32, i32, i32, i32
  }
  func.func @transform_1(%arg0: i32, %arg1: i32) -> (i32, i32) {
    %c0_i32 = arith.constant 0 : i32
    %c0_i32_0 = arith.constant 0 : i32
    %c0_i32_1 = arith.constant 0 : i32
    return %c0_i32, %c0_i32_0 : i32, i32
  }
  func.func @transform_2(%arg0: i32, %arg1: i32) -> (i32, i32) {
    %c0_i32 = arith.constant 0 : i32
    %c0_i32_0 = arith.constant 0 : i32
    %c0_i32_1 = arith.constant 0 : i32
    return %c0_i32, %c0_i32_0 : i32, i32
  }
  func.func @transform_3(%arg0: i32, %arg1: i32) -> (i32, i32) {
    %c0_i32 = arith.constant 0 : i32
    %c0_i32_0 = arith.constant 0 : i32
    %c0_i32_1 = arith.constant 0 : i32
    return %c0_i32, %c0_i32_0 : i32, i32
  }
  func.func @transform_4(%arg0: i32, %arg1: i32) -> (i32, i32) {
    %c0_i32 = arith.constant 0 : i32
    %c0_i32_0 = arith.constant 0 : i32
    %c0_i32_1 = arith.constant 0 : i32
    return %c0_i32, %c0_i32_0 : i32, i32
  }
  func.func @transform_5(%arg0: i32, %arg1: i32) -> (i32, i32) {
    %c0_i32 = arith.constant 0 : i32
    %c0_i32_0 = arith.constant 0 : i32
    %c0_i32_1 = arith.constant 0 : i32
    return %c0_i32, %c0_i32_0 : i32, i32
  }
  func.func @transform_6(%arg0: i32, %arg1: i32) -> (i32, i32) {
    %c0_i32 = arith.constant 0 : i32
    %c0_i32_0 = arith.constant 0 : i32
    %c0_i32_1 = arith.constant 0 : i32
    return %c0_i32, %c0_i32_0 : i32, i32
  }
  func.func @transform_7(%arg0: i32, %arg1: i32) -> (i32, i32, i32, i32) {
    %c0_i32 = arith.constant 0 : i32
    %c0_i32_0 = arith.constant 0 : i32
    %c0_i32_1 = arith.constant 0 : i32
    return %arg0, %arg1, %c0_i32, %c0_i32_0 : i32, i32, i32, i32
  }
}

</mosaic_0001>

<llo_original>
// kernel: basic_block_forward.1
$region0: #{basic_block_forward.1}
  #allocation0 [shape = 'u32[]', space=smem, size = 0x4, offset = 0x4, fixed_abs, tag = 'smem constant byte address 0x4 - core index']
  #allocation1 [shape = 'u32[72,128]{1,0:T(1,128)}', space=vmem, size = 0x9000, scoped, tag = 'internal scratch']
  %s0 = inlined_call_operand.vmem [shape: f32[2,16,16,4], index: 0, kind: input, shape index: {}]
  %s1 = inlined_call_operand.vmem [shape: bf16[36,4], index: 1, kind: input, shape index: {}]
  %s2 = inlined_call_operand.vmem [shape: bf16[36,4], index: 2, kind: input, shape index: {}]
  %s3 = inlined_call_operand.vmem [shape: f32[1,4], index: 3, kind: input, shape index: {}]
  %s4 = inlined_call_operand.vmem [shape: f32[1,4], index: 4, kind: input, shape index: {}]
  %s5 = inlined_call_operand.vmem [shape: f32[1,4], index: 5, kind: input, shape index: {}]
  %s6 = inlined_call_operand.vmem [shape: f32[1,4], index: 6, kind: input, shape index: {}]
  %s7 = inlined_call_operand.vmem [shape: f32[2,16,16,4], index: 7, kind: output, shape index: {}]
  %s8 = sld [smem:[#allocation0]]
  $region61: #{basic_block_forward.1} parent=0
    _
  %s10 = ssub.s32 1, %s8
  %s11 = scalar_select 0, %s10, %s8
  loop: start=0, step=1, limit=6
  $region2: #{basic_block_forward.1} parent=0 // loop_pre_header
    _
  $region3: #{basic_block_forward.1} parent=0 // loop_header
    %s13 = sphi 0, %s17
    %p14 = scmp.ge.s32.totalorder %s13, 6
    %s20 = sphi 0, %s32
    %s21 = sphi 0, %s28
    %s22 = sphi 0, %s20
    %s23 = sphi 0, %s21
    %s24 = sphi 0, %s22
    %s25 = sphi 0, %s23
    %s35 = sphi 0, %s37
    %s38 = sphi 0, %s35
    %s39 = sphi 0, %s38
    %s55 = sphi 0, %s39
    %s59 = sphi 0, %s59
    %s61 = sphi 0, %s59
    %s62 = sphi 0, %s61
    %s76 = sphi 0, %s62
    %s80 = sphi 0, %s80
    %s82 = sphi 0, %s80
    %s83 = sphi 0, %s82
    %s97 = sphi 0, %s83
    %s101 = sphi 0, %s101
    %s103 = sphi 0, %s101
    %s104 = sphi 0, %s103
    %s118 = sphi 0, %s104
    %s122 = sphi 0, %s122
    %s124 = sphi 0, %s122
    %s125 = sphi 0, %s124
    %s139 = sphi 0, %s125
    %s143 = sphi 0, %s143
    %s145 = sphi 0, %s143
    %s146 = sphi 0, %s145
    %s160 = sphi 0, %s146
    %s164 = sphi 0, %s164
    %s166 = sphi 0, %s164
    %s167 = sphi 0, %s166
    %s181 = sphi 0, %s167
    %s189 = sphi 0, %s191
    %s192 = sphi 0, %s189
    %s193 = sphi 0, %s192
    %s209 = sphi 0, %s193
  $region4: #{basic_block_forward.1} parent=0 // loop_header_branch
    %16 = sbr.rel (%p14) target = $region8
  $region5: #{basic_block_forward.1} parent=0 // loop_body
    %s18 = ssub.s32 %s13, 1
    %s19 = ssub.s32 %s13, 2
    %s26 = sadd.s32 1, %s21
    %p27 = scmp.ge.s32.totalorder %s26, 2
    %s28 = scalar_select %p27, 0, %s26
    %s29 = sadd.s32 1, %s20
    %s30 = scalar_select %p27, %s29, %s20
    %p31 = scmp.ge.s32.totalorder %s30, 2
    %s32 = scalar_select %p31, 0, %s30
    %s33 = ssub.s32 %s20, %s32
    %p34 = scmp.eq.s32.totalorder %s33, 0
    %s36 = sadd.s32 %s35, 1
    %s37 = scalar_select %p34, %s35, %s36
    %p40 = pneg %p34
    %p41 = scmp.eq.s32.totalorder %s13, 3
    %p42 = por %p40, %p41
    %p43 = scmp.ne.s32.totalorder %s35, %s38
    %p44 = scmp.eq.s32.totalorder %s13, 0
    %p45 = por %p43, %p44
    %p46 = scmp.ne.s32.totalorder %s35, %s38
    %p47 = scmp.eq.s32.totalorder %s18, 3
    %p48 = por %p46, %p47
    %p49 = scmp.ne.s32.totalorder %s38, %s39
    %p50 = scmp.eq.s32.totalorder %s18, 0
    %p51 = por %p49, %p50
    %p52 = scmp.ne.s32.totalorder %s38, %s39
    %p53 = scmp.eq.s32.totalorder %s19, 3
    %p54 = por %p52, %p53
    %p56 = scmp.ne.s32.totalorder %s39, %s55
    %p57 = scmp.eq.s32.totalorder %s19, 0
    %p58 = por %p56, %p57
    %s60 = sadd.s32 %s59, 1
    %p63 = scmp.eq.s32.totalorder %s13, 3
    %p64 = scmp.ne.s32.totalorder %s59, %s61
    %p65 = scmp.eq.s32.totalorder %s13, 0
    %p66 = por %p64, %p65
    %p67 = scmp.ne.s32.totalorder %s59, %s61
    %p68 = scmp.eq.s32.totalorder %s18, 3
    %p69 = por %p67, %p68
    %p70 = scmp.ne.s32.totalorder %s61, %s62
    %p71 = scmp.eq.s32.totalorder %s18, 0
    %p72 = por %p70, %p71
    %p73 = scmp.ne.s32.totalorder %s61, %s62
    %p74 = scmp.eq.s32.totalorder %s19, 3
    %p75 = por %p73, %p74
    %p77 = scmp.ne.s32.totalorder %s62, %s76
    %p78 = scmp.eq.s32.totalorder %s19, 0
    %p79 = por %p77, %p78
    %s81 = sadd.s32 %s80, 1
    %p84 = scmp.eq.s32.totalorder %s13, 3
    %p85 = scmp.ne.s32.totalorder %s80, %s82
    %p86 = scmp.eq.s32.totalorder %s13, 0
    %p87 = por %p85, %p86
    %p88 = scmp.ne.s32.totalorder %s80, %s82
    %p89 = scmp.eq.s32.totalorder %s18, 3
    %p90 = por %p88, %p89
    %p91 = scmp.ne.s32.totalorder %s82, %s83
    %p92 = scmp.eq.s32.totalorder %s18, 0
    %p93 = por %p91, %p92
    %p94 = scmp.ne.s32.totalorder %s82, %s83
    %p95 = scmp.eq.s32.totalorder %s19, 3
    %p96 = por %p94, %p95
    %p98 = scmp.ne.s32.totalorder %s83, %s97
    %p99 = scmp.eq.s32.totalorder %s19, 0
    %p100 = por %p98, %p99
    %s102 = sadd.s32 %s101, 1
    %p105 = scmp.eq.s32.totalorder %s13, 3
    %p106 = scmp.ne.s32.totalorder %s101, %s103
    %p107 = scmp.eq.s32.totalorder %s13, 0
    %p108 = por %p106, %p107
    %p109 = scmp.ne.s32.totalorder %s101, %s103
    %p110 = scmp.eq.s32.totalorder %s18, 3
    %p111 = por %p109, %p110
    %p112 = scmp.ne.s32.totalorder %s103, %s104
    %p113 = scmp.eq.s32.totalorder %s18, 0
    %p114 = por %p112, %p113
    %p115 = scmp.ne.s32.totalorder %s103, %s104
    %p116 = scmp.eq.s32.totalorder %s19, 3
    %p117 = por %p115, %p116
    %p119 = scmp.ne.s32.totalorder %s104, %s118
    %p120 = scmp.eq.s32.totalorder %s19, 0
    %p121 = por %p119, %p120
    %s123 = sadd.s32 %s122, 1
    %p126 = scmp.eq.s32.totalorder %s13, 3
    %p127 = scmp.ne.s32.totalorder %s122, %s124
    %p128 = scmp.eq.s32.totalorder %s13, 0
    %p129 = por %p127, %p128
    %p130 = scmp.ne.s32.totalorder %s122, %s124
    %p131 = scmp.eq.s32.totalorder %s18, 3
    %p132 = por %p130, %p131
    %p133 = scmp.ne.s32.totalorder %s124, %s125
    %p134 = scmp.eq.s32.totalorder %s18, 0
    %p135 = por %p133, %p134
    %p136 = scmp.ne.s32.totalorder %s124, %s125
    %p137 = scmp.eq.s32.totalorder %s19, 3
    %p138 = por %p136, %p137
    %p140 = scmp.ne.s32.totalorder %s125, %s139
    %p141 = scmp.eq.s32.totalorder %s19, 0
    %p142 = por %p140, %p141
    %s144 = sadd.s32 %s143, 1
    %p147 = scmp.eq.s32.totalorder %s13, 3
    %p148 = scmp.ne.s32.totalorder %s143, %s145
    %p149 = scmp.eq.s32.totalorder %s13, 0
    %p150 = por %p148, %p149
    %p151 = scmp.ne.s32.totalorder %s143, %s145
    %p152 = scmp.eq.s32.totalorder %s18, 3
    %p153 = por %p151, %p152
    %p154 = scmp.ne.s32.totalorder %s145, %s146
    %p155 = scmp.eq.s32.totalorder %s18, 0
    %p156 = por %p154, %p155
    %p157 = scmp.ne.s32.totalorder %s145, %s146
    %p158 = scmp.eq.s32.totalorder %s19, 3
    %p159 = por %p157, %p158
    %p161 = scmp.ne.s32.totalorder %s146, %s160
    %p162 = scmp.eq.s32.totalorder %s19, 0
    %p163 = por %p161, %p162
    %s165 = sadd.s32 %s164, 1
    %p168 = scmp.eq.s32.totalorder %s13, 3
    %p169 = scmp.ne.s32.totalorder %s164, %s166
    %p170 = scmp.eq.s32.totalorder %s13, 0
    %p171 = por %p169, %p170
    %p172 = scmp.ne.s32.totalorder %s164, %s166
    %p173 = scmp.eq.s32.totalorder %s18, 3
    %p174 = por %p172, %p173
    %p175 = scmp.ne.s32.totalorder %s166, %s167
    %p176 = scmp.eq.s32.totalorder %s18, 0
    %p177 = por %p175, %p176
    %p178 = scmp.ne.s32.totalorder %s166, %s167
    %p179 = scmp.eq.s32.totalorder %s19, 3
    %p180 = por %p178, %p179
    %p182 = scmp.ne.s32.totalorder %s167, %s181
    %p183 = scmp.eq.s32.totalorder %s19, 0
    %p184 = por %p182, %p183
    %s185 = ssub.s32 %s20, %s32
    %s186 = ssub.s32 %s21, %s28
    %s187 = sor.u32 %s185, %s186
    %p188 = scmp.eq.s32.totalorder %s187, 0
    %s190 = sadd.s32 %s189, 1
    %s191 = scalar_select %p188, %s189, %s190
    %p194 = pneg %p188
    %p195 = scmp.eq.s32.totalorder %s13, 3
    %p196 = por %p194, %p195
    %p197 = scmp.ne.s32.totalorder %s189, %s192
    %p198 = scmp.eq.s32.totalorder %s13, 0
    %p199 = por %p197, %p198
    %p200 = scmp.ne.s32.totalorder %s189, %s192
    %p201 = scmp.eq.s32.totalorder %s18, 3
    %p202 = por %p200, %p201
    %p203 = scmp.ne.s32.totalorder %s192, %s193
    %p204 = scmp.eq.s32.totalorder %s18, 0
    %p205 = por %p203, %p204
    %p206 = scmp.ne.s32.totalorder %s192, %s193
    %p207 = scmp.eq.s32.totalorder %s19, 3
    %p208 = por %p206, %p207
    %p210 = scmp.ne.s32.totalorder %s193, %s209
    %p211 = scmp.eq.s32.totalorder %s19, 0
    %p212 = por %p210, %p211
    %p213 = scmp.le.s32.totalorder 1, %s13
    %p214 = scmp.lt.s32.totalorder %s13, 5
    %p215 = pnand %p213, %p214
    %p216 = pneg %p215
    // Predicated region
    $region9: #{basic_block_forward.1} parent=5 // pred_check
      _
    $region10: #{basic_block_forward.1} parent=5 // pred_check_branch
      %218 = sbr.rel (%p215) target = $region12
    $region11: #{basic_block_forward.1} parent=5 // pred_region
      %s219 = ssub.s32 %s13, 1
      // Predicated region
      $region13: #{basic_block_forward.1} parent=11 // pred_check
        %p220 = pneg %p72
      $region14: #{basic_block_forward.1} parent=11 // pred_check_branch
        %222 = sbr.rel (%p220) target = $region16
      $region15: #{basic_block_forward.1} parent=11 // pred_region
        _
      $region16: #{basic_block_forward.1} parent=11 // pred_fallthru
        _
      // Predicated region
      $region17: #{basic_block_forward.1} parent=11 // pred_check
        %p223 = pneg %p93
      $region18: #{basic_block_forward.1} parent=11 // pred_check_branch
        %225 = sbr.rel (%p223) target = $region20
      $region19: #{basic_block_forward.1} parent=11 // pred_region
        _
      $region20: #{basic_block_forward.1} parent=11 // pred_fallthru
        _
      // Predicated region
      $region21: #{basic_block_forward.1} parent=11 // pred_check
        %p226 = pneg %p114
      $region22: #{basic_block_forward.1} parent=11 // pred_check_branch
        %228 = sbr.rel (%p226) target = $region24
      $region23: #{basic_block_forward.1} parent=11 // pred_region
        _
      $region24: #{basic_block_forward.1} parent=11 // pred_fallthru
        _
      // Predicated region
      $region25: #{basic_block_forward.1} parent=11 // pred_check
        %p229 = pneg %p135
      $region26: #{basic_block_forward.1} parent=11 // pred_check_branch
        %231 = sbr.rel (%p229) target = $region28
      $region27: #{basic_block_forward.1} parent=11 // pred_region
        _
      $region28: #{basic_block_forward.1} parent=11 // pred_fallthru
        _
      // Predicated region
      $region29: #{basic_block_forward.1} parent=11 // pred_check
        %p232 = pneg %p156
      $region30: #{basic_block_forward.1} parent=11 // pred_check_branch
        %234 = sbr.rel (%p232) target = $region32
      $region31: #{basic_block_forward.1} parent=11 // pred_region
        _
      $region32: #{basic_block_forward.1} parent=11 // pred_fallthru
        _
      // Predicated region
      $region33: #{basic_block_forward.1} parent=11 // pred_check
        %p235 = pneg %p177
      $region34: #{basic_block_forward.1} parent=11 // pred_check_branch
        %237 = sbr.rel (%p235) target = $region36
      $region35: #{basic_block_forward.1} parent=11 // pred_region
        _
      $region36: #{basic_block_forward.1} parent=11 // pred_fallthru
        _
    $region12: #{basic_block_forward.1} parent=5 // pred_fallthru
      _
    %p238 = scmp.lt.s32.totalorder %s13, 4
    // Predicated region
    $region37: #{basic_block_forward.1} parent=5 // pred_check
      %p239 = pneg %p238
    $region38: #{basic_block_forward.1} parent=5 // pred_check_branch
      %241 = sbr.rel (%p239) target = $region40
    $region39: #{basic_block_forward.1} parent=5 // pred_region
      // Predicated region
      $region41: #{basic_block_forward.1} parent=39 // pred_check
        %p242 = pneg %p45
      $region42: #{basic_block_forward.1} parent=39 // pred_check_branch
        %244 = sbr.rel (%p242) target = $region44
      $region43: #{basic_block_forward.1} parent=39 // pred_region
        %p245 = scmp.lt.s32.totalorder %s20, 1
        %s246 = scalar_select %p245, %s20, 1
        %s247 = smul.addr %s246, 32
        %s248 = smul.addr %s247, 8
        %s249 = scalar_lea.vmem %s0, %s248
      $region44: #{basic_block_forward.1} parent=39 // pred_fallthru
        _
    $region40: #{basic_block_forward.1} parent=5 // pred_fallthru
      _
    %p250 = scmp.le.s32.totalorder 1, %s13
    %p251 = scmp.lt.s32.totalorder %s13, 5
    %p252 = pnand %p250, %p251
    %p253 = pneg %p252
    // Predicated region
    $region45: #{basic_block_forward.1} parent=5 // pred_check
      _
    $region46: #{basic_block_forward.1} parent=5 // pred_check_branch
      %255 = sbr.rel (%p252) target = $region48
    $region47: #{basic_block_forward.1} parent=5 // pred_region
      %s256 = ssub.s32 %s13, 1
      %p257 = scmp.lt.s32.totalorder %s22, 1
      %s258 = scalar_select %p257, %s22, 1
      %s259 = smul.addr %s258, 32
      %s260 = smul.addr %s259, 8
      %s261 = scalar_lea.vmem %s0, %s260
      %p262 = pneg %p51
      %p263 = pneg %p48
      %p264 = pneg %p72
      %p265 = pneg %p69
      %p266 = pneg %p93
      %p267 = pneg %p90
      %p268 = pneg %p114
      %p269 = pneg %p111
      %p270 = pneg %p135
      %p271 = pneg %p132
      %p272 = pneg %p156
      %p273 = pneg %p153
      %p274 = pneg %p177
      %p275 = pneg %p174
      %p276 = pneg %p205
      %p277 = pneg %p202
      %s278 = smul.u32 8, %s23
      %p279 = scmp.lt.s32.totalorder %s22, 1
      %s280 = scalar_select %p279, %s22, 1
      %p281 = scmp.lt.s32.totalorder %s278, 15
      %s282 = scalar_select %p281, %s278, 15
      %s283 = smul.addr %s282, 2
      %s284 = smul.addr %s280, 32
      %s285 = sadd.s32 %s283, %s284
      %s286 = smul.addr %s285, 8
      %s287 = scalar_lea.vmem %s7, %s286
      %p288 = scmp.lt.s32.totalorder %s22, 1
      %s289 = scalar_select %p288, %s22, 1
      %s290 = smul.addr %s289, 32
      %s291 = smul.addr %s290, 8
      %s292 = scalar_lea.vmem %s0, %s291
      %s293 = smul.u32 8, %s23
      %p294 = scmp.lt.s32.totalorder %s22, 1
      %s295 = scalar_select %p294, %s22, 1
      %p296 = scmp.lt.s32.totalorder %s293, 15
      %s297 = scalar_select %p296, %s293, 15
      %s298 = smul.addr %s297, 2
      %s299 = smul.addr %s295, 32
      %s300 = sadd.s32 %s298, %s299
      %s301 = smul.addr %s300, 8
      %s302 = scalar_lea.vmem %s7, %s301
      %s303 = smul.u32 8, %s23
      %s305 = smul.u32 %s23, 8
      %s306 = smul.u32 %s305, 16
      %s307 = scalar_lea.vmem %s292, %s306
      %v308 = vld [vmem:[%s307] sm:$0xff]
      %v309 = vld [vmem:[%s307 + $0x8] sm:$0xff]
      %v310 = vld [vmem:[%s307 + $0x10] sm:$0xff]
      %v311 = vld [vmem:[%s307 + $0x18] sm:$0xff]
      %v312 = vld [vmem:[%s307 + $0x20] sm:$0xff]
      %v313 = vld [vmem:[%s307 + $0x28] sm:$0xff]
      %v314 = vld [vmem:[%s307 + $0x30] sm:$0xff]
      %v315 = vld [vmem:[%s307 + $0x38] sm:$0xff]
      %v316 = vld [vmem:[%s307 + $0x40] sm:$0xff]
      %v317 = vld [vmem:[%s307 + $0x48] sm:$0xff]
      %v318 = vld [vmem:[%s307 + $0x50] sm:$0xff]
      %v319 = vld [vmem:[%s307 + $0x58] sm:$0xff]
      %v320 = vld [vmem:[%s307 + $0x60] sm:$0xff]
      %v321 = vld [vmem:[%s307 + $0x68] sm:$0xff]
      %v322 = vld [vmem:[%s307 + $0x70] sm:$0xff]
      %v323 = vld [vmem:[%s307 + $0x78] sm:$0xff]
      %s324 = ssub.s32 %s305, 2
      %p325 = scmp.gt.s32.totalorder %s324, 0
      %s326 = scalar_select %p325, %s324, 0
      %s327 = smul.u32 %s326, 16
      %s328 = scalar_lea.vmem %s292, %s327
      %v329 = vld [vmem:[%s328] sm:$0xff]
      %v330 = vld [vmem:[%s328 + $0x8] sm:$0xff]
      %v331 = vld [vmem:[%s328 + $0x10] sm:$0xff]
      %v332 = vld [vmem:[%s328 + $0x18] sm:$0xff]
      %p333 = scmp.gt.s32.totalorder %s23, 0
      %s334 = scalar_select %p333, 1, 0
      %s335 = scvt.s32.f32 %s334
      %v336 = vstv %s335
      %v337 = vmul.f32 %v329, %v336
      %v338 = vmul.f32 %v330, %v336
      %v339 = vmul.f32 %v331, %v336
      %v340 = vmul.f32 %v332, %v336
      %s341 = sadd.s32 %s305, 8
      %p342 = scmp.lt.s32.totalorder %s341, 14
      %s343 = scalar_select %p342, %s341, 14
      %s344 = smul.u32 %s343, 16
      %s345 = scalar_lea.vmem %s292, %s344
      %v346 = vld [vmem:[%s345] sm:$0xff]
      %v347 = vld [vmem:[%s345 + $0x8] sm:$0xff]
      %v348 = vld [vmem:[%s345 + $0x10] sm:$0xff]
      %v349 = vld [vmem:[%s345 + $0x18] sm:$0xff]
      %s350 = sadd.s32 %s23, 1
      %p351 = scmp.lt.s32.totalorder %s350, 2
      %s352 = scalar_select %p351, 1, 0
      %s353 = scvt.s32.f32 %s352
      %v354 = vstv %s353
      %v355 = vmul.f32 %v346, %v354
      %v356 = vmul.f32 %v347, %v354
      %v357 = vmul.f32 %v348, %v354
      %v358 = vmul.f32 %v349, %v354
      %v359 = vpack.c.bf16 %v337, %v337
      %v360 = vpack.c.bf16 %v338, %v338
      %v361 = vpack.c.bf16 %v339, %v339
      %v362 = vpack.c.bf16 %v340, %v340
      %v363 = vpack.c.bf16 %v308, %v308
      %v364 = vpack.c.bf16 %v309, %v309
      %v365 = vpack.c.bf16 %v310, %v310
      %v366 = vpack.c.bf16 %v311, %v311
      %v367 = vpack.c.bf16 %v312, %v312
      %v368 = vpack.c.bf16 %v313, %v313
      %v369 = vpack.c.bf16 %v314, %v314
      %v370 = vpack.c.bf16 %v315, %v315
      %v371 = vpack.c.bf16 %v316, %v316
      %v372 = vpack.c.bf16 %v317, %v317
      %v373 = vpack.c.bf16 %v318, %v318
      %v374 = vpack.c.bf16 %v319, %v319
      %v375 = vpack.c.bf16 %v320, %v320
      %v376 = vpack.c.bf16 %v321, %v321
      %v377 = vpack.c.bf16 %v322, %v322
      %v378 = vpack.c.bf16 %v323, %v323
      %v379 = vpack.c.bf16 %v355, %v355
      %v380 = vpack.c.bf16 %v356, %v356
      %v381 = vpack.c.bf16 %v357, %v357
      %v382 = vpack.c.bf16 %v358, %v358
      %v407 = vunpack.c.l.b16 %v359
      %v408 = vunpack.c.l.b16 %v360
      %v409 = vunpack.c.l.b16 %v361
      %v410 = vunpack.c.l.b16 %v362
      %v411 = vunpack.c.l.b16 %v363
      %v412 = vunpack.c.l.b16 %v364
      %v413 = vunpack.c.l.b16 %v365
      %v414 = vunpack.c.l.b16 %v366
      %v415 = vunpack.c.l.b16 %v367
      %v416 = vunpack.c.l.b16 %v368
      %v417 = vunpack.c.l.b16 %v369
      %v418 = vunpack.c.l.b16 %v370
      %v419 = vunpack.c.l.b16 %v371
      %v420 = vunpack.c.l.b16 %v372
      %v421 = vunpack.c.l.b16 %v373
      %v422 = vunpack.c.l.b16 %v374
      %v423 = vunpack.c.l.b16 %v375
      %v424 = vunpack.c.l.b16 %v376
      %v425 = vunpack.c.l.b16 %v377
      %v426 = vunpack.c.l.b16 %v378
      %v427 = vunpack.c.l.b16 %v379
      %v428 = vunpack.c.l.b16 %v380
      %v429 = vunpack.c.l.b16 %v381
      %v430 = vunpack.c.l.b16 %v382
      %v431 = vpack.c.b16 %v408, %v407
      %v432 = vpack.c.b16 %v410, %v409
      %v433 = vpack.c.b16 %v412, %v411
      %v434 = vpack.c.b16 %v414, %v413
      %v435 = vpack.c.b16 %v416, %v415
      %v436 = vpack.c.b16 %v418, %v417
      %v437 = vpack.c.b16 %v420, %v419
      %v438 = vpack.c.b16 %v422, %v421
      %v439 = vpack.c.b16 %v424, %v423
      %v440 = vpack.c.b16 %v426, %v425
      %v441 = vpack.c.b16 %v428, %v427
      %v442 = vpack.c.b16 %v430, %v429
      %v444 = vshrl.u32 %v431, 16
      %v446 = vrot.slane %v444, 7
      %v447 = vshll.u32 %v431, 16
      %v449 = vor.u32 %v446, %v447
      %v451 = vshrl.u32 %v432, 16
      %v453 = vrot.slane %v451, 7
      %v454 = vshll.u32 %v432, 16
      %v456 = vor.u32 %v453, %v454
      %v458 = vshrl.u32 %v433, 16
      %v460 = vrot.slane %v458, 7
      %v461 = vshll.u32 %v433, 16
      %v463 = vor.u32 %v460, %v461
      %v465 = vshrl.u32 %v434, 16
      %v467 = vrot.slane %v465, 7
      %v468 = vshll.u32 %v434, 16
      %v470 = vor.u32 %v467, %v468
      %v472 = vshrl.u32 %v435, 16
      %v474 = vrot.slane %v472, 7
      %v475 = vshll.u32 %v435, 16
      %v477 = vor.u32 %v474, %v475
      %v479 = vshrl.u32 %v436, 16
      %v481 = vrot.slane %v479, 7
      %v482 = vshll.u32 %v436, 16
      %v484 = vor.u32 %v481, %v482
      %v486 = vshrl.u32 %v437, 16
      %v488 = vrot.slane %v486, 7
      %v489 = vshll.u32 %v437, 16
      %v491 = vor.u32 %v488, %v489
      %v493 = vshrl.u32 %v438, 16
      %v495 = vrot.slane %v493, 7
      %v496 = vshll.u32 %v438, 16
      %v498 = vor.u32 %v495, %v496
      %v500 = vshrl.u32 %v439, 16
      %v502 = vrot.slane %v500, 7
      %v503 = vshll.u32 %v439, 16
      %v505 = vor.u32 %v502, %v503
      %v507 = vshrl.u32 %v440, 16
      %v509 = vrot.slane %v507, 7
      %v510 = vshll.u32 %v440, 16
      %v512 = vor.u32 %v509, %v510
      %v514 = vshrl.u32 %v441, 16
      %v516 = vrot.slane %v514, 7
      %v517 = vshll.u32 %v441, 16
      %v519 = vor.u32 %v516, %v517
      %v521 = vshrl.u32 %v442, 16
      %v523 = vrot.slane %v521, 7
      %v524 = vshll.u32 %v442, 16
      %v526 = vor.u32 %v523, %v524
      %vm551 = vcmask 1040384
      %vm552 = vsmask.f32 256
      %vm553 = vmand %vm551, %vm552
      %v554 = vsel %vm553, 0, %v449
      %v555 = vsel %vm553, 0, %v456
      %v556 = vsel %vm553, 0, %v463
      %v557 = vsel %vm553, 0, %v470
      %v558 = vsel %vm553, 0, %v477
      %v559 = vsel %vm553, 0, %v484
      %v560 = vsel %vm553, 0, %v491
      %v561 = vsel %vm553, 0, %v498
      %v562 = vsel %vm553, 0, %v505
      %v563 = vsel %vm553, 0, %v512
      %v564 = vsel %vm553, 0, %v519
      %v565 = vsel %vm553, 0, %v526
      %v566 = vsel %vm553, %v446, 0
      %v567 = vsel %vm553, %v453, 0
      %v568 = vsel %vm553, %v460, 0
      %v569 = vsel %vm553, %v467, 0
      %v570 = vsel %vm553, %v474, 0
      %v571 = vsel %vm553, %v481, 0
      %v572 = vsel %vm553, %v488, 0
      %v573 = vsel %vm553, %v495, 0
      %v574 = vsel %vm553, %v502, 0
      %v575 = vsel %vm553, %v509, 0
      %v576 = vsel %vm553, %v516, 0
      %v577 = vsel %vm553, %v523, 0
      %vm578 = vsmask.f32 7424
      %v580 = vshrl.u32 %v554, 16
      %v582 = vshll.u32 %v554, 16
      %v584 = vrot.slane %v582, 1
      %v585 = vor.u32 %v580, %v584
      %v587 = vshll.u32 %v566, 16
      %v589 = vrot.slane %v587, 1
      %v590 = vsel %vm578, %v585, %v589
      %v592 = vshrl.u32 %v555, 16
      %v594 = vshll.u32 %v555, 16
      %v596 = vrot.slane %v594, 1
      %v597 = vor.u32 %v592, %v596
      %v599 = vshll.u32 %v567, 16
      %v601 = vrot.slane %v599, 1
      %v602 = vsel %vm578, %v597, %v601
      %v604 = vshrl.u32 %v556, 16
      %v606 = vshll.u32 %v556, 16
      %v608 = vrot.slane %v606, 1
      %v609 = vor.u32 %v604, %v608
      %v611 = vshll.u32 %v568, 16
      %v613 = vrot.slane %v611, 1
      %v614 = vsel %vm578, %v609, %v613
      %v616 = vshrl.u32 %v557, 16
      %v618 = vshll.u32 %v557, 16
      %v620 = vrot.slane %v618, 1
      %v621 = vor.u32 %v616, %v620
      %v623 = vshll.u32 %v569, 16
      %v625 = vrot.slane %v623, 1
      %v626 = vsel %vm578, %v621, %v625
      %v628 = vshrl.u32 %v558, 16
      %v630 = vshll.u32 %v558, 16
      %v632 = vrot.slane %v630, 1
      %v633 = vor.u32 %v628, %v632
      %v635 = vshll.u32 %v570, 16
      %v637 = vrot.slane %v635, 1
      %v638 = vsel %vm578, %v633, %v637
      %v640 = vshrl.u32 %v559, 16
      %v642 = vshll.u32 %v559, 16
      %v644 = vrot.slane %v642, 1
      %v645 = vor.u32 %v640, %v644
      %v647 = vshll.u32 %v571, 16
      %v649 = vrot.slane %v647, 1
      %v650 = vsel %vm578, %v645, %v649
      %v652 = vshrl.u32 %v560, 16
      %v654 = vshll.u32 %v560, 16
      %v656 = vrot.slane %v654, 1
      %v657 = vor.u32 %v652, %v656
      %v659 = vshll.u32 %v572, 16
      %v661 = vrot.slane %v659, 1
      %v662 = vsel %vm578, %v657, %v661
      %v664 = vshrl.u32 %v561, 16
      %v666 = vshll.u32 %v561, 16
      %v668 = vrot.slane %v666, 1
      %v669 = vor.u32 %v664, %v668
      %v671 = vshll.u32 %v573, 16
      %v673 = vrot.slane %v671, 1
      %v674 = vsel %vm578, %v669, %v673
      %v676 = vshrl.u32 %v562, 16
      %v678 = vshll.u32 %v562, 16
      %v680 = vrot.slane %v678, 1
      %v681 = vor.u32 %v676, %v680
      %v683 = vshll.u32 %v574, 16
      %v685 = vrot.slane %v683, 1
      %v686 = vsel %vm578, %v681, %v685
      %v688 = vshrl.u32 %v563, 16
      %v690 = vshll.u32 %v563, 16
      %v692 = vrot.slane %v690, 1
      %v693 = vor.u32 %v688, %v692
      %v695 = vshll.u32 %v575, 16
      %v697 = vrot.slane %v695, 1
      %v698 = vsel %vm578, %v693, %v697
      %699 = vrot.lane.b32.xlu0 %v590, 4
      %v700 = vpop.permute.xlu0 %699
      %701 = vrot.lane.b32.xlu0 %v602, 4
      %v702 = vpop.permute.xlu0 %701
      %703 = vrot.lane.b32.xlu0 %v614, 4
      %v704 = vpop.permute.xlu0 %703
      %705 = vrot.lane.b32.xlu0 %v626, 4
      %v706 = vpop.permute.xlu0 %705
      %707 = vrot.lane.b32.xlu0 %v638, 4
      %v708 = vpop.permute.xlu0 %707
      %709 = vrot.lane.b32.xlu0 %v650, 4
      %v710 = vpop.permute.xlu0 %709
      %711 = vrot.lane.b32.xlu0 %v662, 4
      %v712 = vpop.permute.xlu0 %711
      %713 = vrot.lane.b32.xlu0 %v674, 4
      %v714 = vpop.permute.xlu0 %713
      %715 = vrot.lane.b32.xlu0 %v686, 4
      %v716 = vpop.permute.xlu0 %715
      %717 = vrot.lane.b32.xlu0 %v698, 4
      %v718 = vpop.permute.xlu0 %717
      %vm739 = vcmask 1046528
      %v740 = vrot.slane %v554, 1
      %v741 = vrot.slane %v566, 1
      %v742 = vsel %vm739, %v740, %v741
      %v743 = vrot.slane %v555, 1
      %v744 = vrot.slane %v567, 1
      %v745 = vsel %vm739, %v743, %v744
      %v746 = vrot.slane %v556, 1
      %v747 = vrot.slane %v568, 1
      %v748 = vsel %vm739, %v746, %v747
      %v749 = vrot.slane %v557, 1
      %v750 = vrot.slane %v569, 1
      %v751 = vsel %vm739, %v749, %v750
      %v752 = vrot.slane %v558, 1
      %v753 = vrot.slane %v570, 1
      %v754 = vsel %vm739, %v752, %v753
      %v755 = vrot.slane %v559, 1
      %v756 = vrot.slane %v571, 1
      %v757 = vsel %vm739, %v755, %v756
      %v758 = vrot.slane %v560, 1
      %v759 = vrot.slane %v572, 1
      %v760 = vsel %vm739, %v758, %v759
      %v761 = vrot.slane %v561, 1
      %v762 = vrot.slane %v573, 1
      %v763 = vsel %vm739, %v761, %v762
      %v764 = vrot.slane %v562, 1
      %v765 = vrot.slane %v574, 1
      %v766 = vsel %vm739, %v764, %v765
      %v767 = vrot.slane %v563, 1
      %v768 = vrot.slane %v575, 1
      %v769 = vsel %vm739, %v767, %v768
      %770 = vrot.lane.b32.xlu0 %v742, 8
      %v771 = vpop.permute.xlu0 %770
      %772 = vrot.lane.b32.xlu0 %v745, 8
      %v773 = vpop.permute.xlu0 %772
      %774 = vrot.lane.b32.xlu0 %v748, 8
      %v775 = vpop.permute.xlu0 %774
      %776 = vrot.lane.b32.xlu0 %v751, 8
      %v777 = vpop.permute.xlu0 %776
      %778 = vrot.lane.b32.xlu0 %v754, 8
      %v779 = vpop.permute.xlu0 %778
      %780 = vrot.lane.b32.xlu0 %v757, 8
      %v781 = vpop.permute.xlu0 %780
      %782 = vrot.lane.b32.xlu0 %v760, 8
      %v783 = vpop.permute.xlu0 %782
      %784 = vrot.lane.b32.xlu0 %v763, 8
      %v785 = vpop.permute.xlu0 %784
      %786 = vrot.lane.b32.xlu0 %v766, 8
      %v787 = vpop.permute.xlu0 %786
      %788 = vrot.lane.b32.xlu0 %v769, 8
      %v789 = vpop.permute.xlu0 %788
      %791 = vrot.lane.b32.xlu0 %v555, 12
      %v792 = vpop.permute.xlu0 %791
      %793 = vrot.lane.b32.xlu0 %v556, 12
      %v794 = vpop.permute.xlu0 %793
      %795 = vrot.lane.b32.xlu0 %v557, 12
      %v796 = vpop.permute.xlu0 %795
      %797 = vrot.lane.b32.xlu0 %v558, 12
      %v798 = vpop.permute.xlu0 %797
      %799 = vrot.lane.b32.xlu0 %v559, 12
      %v800 = vpop.permute.xlu0 %799
      %801 = vrot.lane.b32.xlu0 %v560, 12
      %v802 = vpop.permute.xlu0 %801
      %803 = vrot.lane.b32.xlu0 %v561, 12
      %v804 = vpop.permute.xlu0 %803
      %805 = vrot.lane.b32.xlu0 %v562, 12
      %v806 = vpop.permute.xlu0 %805
      %807 = vrot.lane.b32.xlu0 %v563, 12
      %v808 = vpop.permute.xlu0 %807
      %809 = vrot.lane.b32.xlu0 %v564, 12
      %v810 = vpop.permute.xlu0 %809
      %v812 = vshrl.u32 %v564, 16
      %v814 = vshll.u32 %v564, 16
      %v816 = vrot.slane %v814, 1
      %v817 = vor.u32 %v812, %v816
      %v819 = vshll.u32 %v576, 16
      %v821 = vrot.slane %v819, 1
      %v822 = vsel %vm578, %v817, %v821
      %823 = vrot.lane.b32.xlu0 %v602, 16
      %v824 = vpop.permute.xlu0 %823
      %825 = vrot.lane.b32.xlu0 %v614, 16
      %v826 = vpop.permute.xlu0 %825
      %827 = vrot.lane.b32.xlu0 %v626, 16
      %v828 = vpop.permute.xlu0 %827
      %829 = vrot.lane.b32.xlu0 %v638, 16
      %v830 = vpop.permute.xlu0 %829
      %831 = vrot.lane.b32.xlu0 %v650, 16
      %v832 = vpop.permute.xlu0 %831
      %833 = vrot.lane.b32.xlu0 %v662, 16
      %v834 = vpop.permute.xlu0 %833
      %835 = vrot.lane.b32.xlu0 %v674, 16
      %v836 = vpop.permute.xlu0 %835
      %837 = vrot.lane.b32.xlu0 %v686, 16
      %v838 = vpop.permute.xlu0 %837
      %839 = vrot.lane.b32.xlu0 %v698, 16
      %v840 = vpop.permute.xlu0 %839
      %841 = vrot.lane.b32.xlu0 %v822, 16
      %v842 = vpop.permute.xlu0 %841
      %v844 = vrot.slane %v564, 1
      %v845 = vrot.slane %v576, 1
      %v846 = vsel %vm739, %v844, %v845
      %847 = vrot.lane.b32.xlu0 %v745, 20
      %v848 = vpop.permute.xlu0 %847
      %849 = vrot.lane.b32.xlu0 %v748, 20
      %v850 = vpop.permute.xlu0 %849
      %851 = vrot.lane.b32.xlu0 %v751, 20
      %v852 = vpop.permute.xlu0 %851
      %853 = vrot.lane.b32.xlu0 %v754, 20
      %v854 = vpop.permute.xlu0 %853
      %855 = vrot.lane.b32.xlu0 %v757, 20
      %v856 = vpop.permute.xlu0 %855
      %857 = vrot.lane.b32.xlu0 %v760, 20
      %v858 = vpop.permute.xlu0 %857
      %859 = vrot.lane.b32.xlu0 %v763, 20
      %v860 = vpop.permute.xlu0 %859
      %861 = vrot.lane.b32.xlu0 %v766, 20
      %v862 = vpop.permute.xlu0 %861
      %863 = vrot.lane.b32.xlu0 %v769, 20
      %v864 = vpop.permute.xlu0 %863
      %865 = vrot.lane.b32.xlu0 %v846, 20
      %v866 = vpop.permute.xlu0 %865
      %868 = vrot.lane.b32.xlu0 %v556, 24
      %v869 = vpop.permute.xlu0 %868
      %870 = vrot.lane.b32.xlu0 %v557, 24
      %v871 = vpop.permute.xlu0 %870
      %872 = vrot.lane.b32.xlu0 %v558, 24
      %v873 = vpop.permute.xlu0 %872
      %874 = vrot.lane.b32.xlu0 %v559, 24
      %v875 = vpop.permute.xlu0 %874
      %876 = vrot.lane.b32.xlu0 %v560, 24
      %v877 = vpop.permute.xlu0 %876
      %878 = vrot.lane.b32.xlu0 %v561, 24
      %v879 = vpop.permute.xlu0 %878
      %880 = vrot.lane.b32.xlu0 %v562, 24
      %v881 = vpop.permute.xlu0 %880
      %882 = vrot.lane.b32.xlu0 %v563, 24
      %v883 = vpop.permute.xlu0 %882
      %884 = vrot.lane.b32.xlu0 %v564, 24
      %v885 = vpop.permute.xlu0 %884
      %886 = vrot.lane.b32.xlu0 %v565, 24
      %v887 = vpop.permute.xlu0 %886
      %v889 = vshrl.u32 %v565, 16
      %v891 = vshll.u32 %v565, 16
      %v893 = vrot.slane %v891, 1
      %v894 = vor.u32 %v889, %v893
      %v896 = vshll.u32 %v577, 16
      %v898 = vrot.slane %v896, 1
      %v899 = vsel %vm578, %v894, %v898
      %900 = vrot.lane.b32.xlu0 %v614, 28
      %v901 = vpop.permute.xlu0 %900
      %902 = vrot.lane.b32.xlu0 %v626, 28
      %v903 = vpop.permute.xlu0 %902
      %904 = vrot.lane.b32.xlu0 %v638, 28
      %v905 = vpop.permute.xlu0 %904
      %906 = vrot.lane.b32.xlu0 %v650, 28
      %v907 = vpop.permute.xlu0 %906
      %908 = vrot.lane.b32.xlu0 %v662, 28
      %v909 = vpop.permute.xlu0 %908
      %910 = vrot.lane.b32.xlu0 %v674, 28
      %v911 = vpop.permute.xlu0 %910
      %912 = vrot.lane.b32.xlu0 %v686, 28
      %v913 = vpop.permute.xlu0 %912
      %914 = vrot.lane.b32.xlu0 %v698, 28
      %v915 = vpop.permute.xlu0 %914
      %916 = vrot.lane.b32.xlu0 %v822, 28
      %v917 = vpop.permute.xlu0 %916
      %918 = vrot.lane.b32.xlu0 %v899, 28
      %v919 = vpop.permute.xlu0 %918
      %v921 = vrot.slane %v565, 1
      %v922 = vrot.slane %v577, 1
      %v923 = vsel %vm739, %v921, %v922
      %924 = vrot.lane.b32.xlu0 %v748, 32
      %v925 = vpop.permute.xlu0 %924
      %926 = vrot.lane.b32.xlu0 %v751, 32
      %v927 = vpop.permute.xlu0 %926
      %928 = vrot.lane.b32.xlu0 %v754, 32
      %v929 = vpop.permute.xlu0 %928
      %930 = vrot.lane.b32.xlu0 %v757, 32
      %v931 = vpop.permute.xlu0 %930
      %932 = vrot.lane.b32.xlu0 %v760, 32
      %v933 = vpop.permute.xlu0 %932
      %934 = vrot.lane.b32.xlu0 %v763, 32
      %v935 = vpop.permute.xlu0 %934
      %936 = vrot.lane.b32.xlu0 %v766, 32
      %v937 = vpop.permute.xlu0 %936
      %938 = vrot.lane.b32.xlu0 %v769, 32
      %v939 = vpop.permute.xlu0 %938
      %940 = vrot.lane.b32.xlu0 %v846, 32
      %v941 = vpop.permute.xlu0 %940
      %942 = vrot.lane.b32.xlu0 %v923, 32
      %v943 = vpop.permute.xlu0 %942
      %vm944 = vcmask 31744
      %v946 = vsel %vm944, %v554, %v700
      %v948 = vsel %vm944, %v555, %v702
      %v950 = vsel %vm944, %v556, %v704
      %v952 = vsel %vm944, %v557, %v706
      %v954 = vsel %vm944, %v558, %v708
      %v956 = vsel %vm944, %v559, %v710
      %v958 = vsel %vm944, %v560, %v712
      %v960 = vsel %vm944, %v561, %v714
      %v962 = vsel %vm944, %v562, %v716
      %v964 = vsel %vm944, %v563, %v718
      %vm965 = vcmask 64512
      %v967 = vsel %vm965, %v946, %v771
      %v969 = vsel %vm965, %v948, %v773
      %v971 = vsel %vm965, %v950, %v775
      %v973 = vsel %vm965, %v952, %v777
      %v975 = vsel %vm965, %v954, %v779
      %v977 = vsel %vm965, %v956, %v781
      %v979 = vsel %vm965, %v958, %v783
      %v981 = vsel %vm965, %v960, %v785
      %v983 = vsel %vm965, %v962, %v787
      %v985 = vsel %vm965, %v964, %v789
      %vm986 = vcmask 97280
      %v988 = vsel %vm986, %v967, %v792
      %v990 = vsel %vm986, %v969, %v794
      %v992 = vsel %vm986, %v971, %v796
      %v994 = vsel %vm986, %v973, %v798
      %v996 = vsel %vm986, %v975, %v800
      %v998 = vsel %vm986, %v977, %v802
      %v1000 = vsel %vm986, %v979, %v804
      %v1002 = vsel %vm986, %v981, %v806
      %v1004 = vsel %vm986, %v983, %v808
      %v1006 = vsel %vm986, %v985, %v810
      %vm1007 = vcmask 130048
      %v1009 = vsel %vm1007, %v988, %v824
      %v1011 = vsel %vm1007, %v990, %v826
      %v1013 = vsel %vm1007, %v992, %v828
      %v1015 = vsel %vm1007, %v994, %v830
      %v1017 = vsel %vm1007, %v996, %v832
      %v1019 = vsel %vm1007, %v998, %v834
      %v1021 = vsel %vm1007, %v1000, %v836
      %v1023 = vsel %vm1007, %v1002, %v838
      %v1025 = vsel %vm1007, %v1004, %v840
      %v1027 = vsel %vm1007, %v1006, %v842
      %vm1028 = vcmask 162816
      %v1030 = vsel %vm1028, %v1009, %v848
      %v1032 = vsel %vm1028, %v1011, %v850
      %v1034 = vsel %vm1028, %v1013, %v852
      %v1036 = vsel %vm1028, %v1015, %v854
      %v1038 = vsel %vm1028, %v1017, %v856
      %v1040 = vsel %vm1028, %v1019, %v858
      %v1042 = vsel %vm1028, %v1021, %v860
      %v1044 = vsel %vm1028, %v1023, %v862
      %v1046 = vsel %vm1028, %v1025, %v864
      %v1048 = vsel %vm1028, %v1027, %v866
      %vm1049 = vcmask 195584
      %v1051 = vsel %vm1049, %v1030, %v869
      %v1053 = vsel %vm1049, %v1032, %v871
      %v1055 = vsel %vm1049, %v1034, %v873
      %v1057 = vsel %vm1049, %v1036, %v875
      %v1059 = vsel %vm1049, %v1038, %v877
      %v1061 = vsel %vm1049, %v1040, %v879
      %v1063 = vsel %vm1049, %v1042, %v881
      %v1065 = vsel %vm1049, %v1044, %v883
      %v1067 = vsel %vm1049, %v1046, %v885
      %v1069 = vsel %vm1049, %v1048, %v887
      %vm1070 = vcmask 228352
      %v1072 = vsel %vm1070, %v1051, %v901
      %v1074 = vsel %vm1070, %v1053, %v903
      %v1076 = vsel %vm1070, %v1055, %v905
      %v1078 = vsel %vm1070, %v1057, %v907
      %v1080 = vsel %vm1070, %v1059, %v909
      %v1082 = vsel %vm1070, %v1061, %v911
      %v1084 = vsel %vm1070, %v1063, %v913
      %v1086 = vsel %vm1070, %v1065, %v915
      %v1088 = vsel %vm1070, %v1067, %v917
      %v1090 = vsel %vm1070, %v1069, %v919
      %vm1091 = vcmask 261120
      %v1093 = vsel %vm1091, %v1072, %v925
      %v1095 = vsel %vm1091, %v1074, %v927
      %v1097 = vsel %vm1091, %v1076, %v929
      %v1099 = vsel %vm1091, %v1078, %v931
      %v1101 = vsel %vm1091, %v1080, %v933
      %v1103 = vsel %vm1091, %v1082, %v935
      %v1105 = vsel %vm1091, %v1084, %v937
      %v1107 = vsel %vm1091, %v1086, %v939
      %v1109 = vsel %vm1091, %v1088, %v941
      %v1111 = vsel %vm1091, %v1090, %v943
      %v1112 = vld [vmem:[%s1] sm:$0xf]
      %v1113 = vld [vmem:[%s1 + $0x4] sm:$0xf]
      %v1114 = vld [vmem:[%s1 + $0x8] sm:$0xf]
      %v1115 = vld [vmem:[%s1 + $0xc] sm:$0xf]
      %v1116 = vld [vmem:[%s1 + $0x10] sm:$0x3]
      %v1122 = vunpack.c.l.b16 %v1112
      %v1123 = vunpack.c.l.b16 %v1113
      %v1124 = vunpack.c.l.b16 %v1114
      %v1125 = vunpack.c.l.b16 %v1115
      %v1126 = vunpack.c.l.b16 %v1116
      %v1127 = vpack.c.b16 %v1123, %v1122
      %v1128 = vpack.c.b16 %v1125, %v1124
      %v1129 = vpack.c.b16 %v1126, %v1126
      %vm1132 = vcmask 293888
      %v1133 = vsel %vm1132, %v1093, 0
      %v1135 = vsel %vm1132, %v1095, 0
      %v1137 = vsel %vm1132, %v1097, 0
      %v1139 = vsel %vm1132, %v1099, 0
      %v1141 = vsel %vm1132, %v1101, 0
      %v1143 = vsel %vm1132, %v1103, 0
      %v1145 = vsel %vm1132, %v1105, 0
      %v1147 = vsel %vm1132, %v1107, 0
      %v1149 = vsel %vm1132, %v1109, 0
      %v1151 = vsel %vm1132, %v1111, 0
      %vm1153 = vcmask 1041408
      %v1155 = vsel %vm1153, %v1129, 0
      %1157 = vmatpush.bf16.msra.mxu0 0
      %1158 = vmatpush.bf16.msra.mxu0 0
      %1159 = vmatpush.bf16.msra.mxu0 0
      %1160 = vmatpush.bf16.msra.mxu0 0
      %1161 = vmatpush.bf16.msra.mxu0 0
      %1162 = vmatpush.bf16.msra.mxu0 %v1155
      %1163 = vmatpush.bf16.msra.mxu0 %v1128
      %1164 = vmatpush.bf16.msra.mxu0 %v1127
      %1165 = vmatmul.bf16.gmra.mxu0 %v1133
      %v1166 = vpop.f32.mrf.mxu0
      %v1167 = vadd.f32 0.0, %v1166
      %v1168 = vpop.f32.mrf.mxu0
      %v1169 = vadd.f32 0.0, %v1168
      %1170 = vmatmul.bf16.gmra.mxu0 %v1135
      %v1171 = vpop.f32.mrf.mxu0
      %v1172 = vadd.f32 0.0, %v1171
      %v1173 = vpop.f32.mrf.mxu0
      %v1174 = vadd.f32 0.0, %v1173
      %1175 = vmatmul.bf16.gmra.mxu0 %v1137
      %v1176 = vpop.f32.mrf.mxu0
      %v1177 = vadd.f32 0.0, %v1176
      %v1178 = vpop.f32.mrf.mxu0
      %v1179 = vadd.f32 0.0, %v1178
      %1180 = vmatmul.bf16.gmra.mxu0 %v1139
      %v1181 = vpop.f32.mrf.mxu0
      %v1182 = vadd.f32 0.0, %v1181
      %v1183 = vpop.f32.mrf.mxu0
      %v1184 = vadd.f32 0.0, %v1183
      %1185 = vmatmul.bf16.gmra.mxu0 %v1141
      %v1186 = vpop.f32.mrf.mxu0
      %v1187 = vadd.f32 0.0, %v1186
      %v1188 = vpop.f32.mrf.mxu0
      %v1189 = vadd.f32 0.0, %v1188
      %1190 = vmatmul.bf16.gmra.mxu0 %v1143
      %v1191 = vpop.f32.mrf.mxu0
      %v1192 = vadd.f32 0.0, %v1191
      %v1193 = vpop.f32.mrf.mxu0
      %v1194 = vadd.f32 0.0, %v1193
      %1195 = vmatmul.bf16.gmra.mxu0 %v1145
      %v1196 = vpop.f32.mrf.mxu0
      %v1197 = vadd.f32 0.0, %v1196
      %v1198 = vpop.f32.mrf.mxu0
      %v1199 = vadd.f32 0.0, %v1198
      %1200 = vmatmul.bf16.gmra.mxu0 %v1147
      %v1201 = vpop.f32.mrf.mxu0
      %v1202 = vadd.f32 0.0, %v1201
      %v1203 = vpop.f32.mrf.mxu0
      %v1204 = vadd.f32 0.0, %v1203
      %1205 = vmatmul.bf16.gmra.mxu0 %v1149
      %v1206 = vpop.f32.mrf.mxu0
      %v1207 = vadd.f32 0.0, %v1206
      %v1208 = vpop.f32.mrf.mxu0
      %v1209 = vadd.f32 0.0, %v1208
      %1210 = vmatmul.bf16.gmra.mxu0 %v1151
      %v1211 = vpop.f32.mrf.mxu0
      %v1212 = vadd.f32 0.0, %v1211
      %v1213 = vpop.f32.mrf.mxu0
      %v1214 = vadd.f32 0.0, %v1213
      %1215 = vdwg.mxu0
      %v1216 = vld [vmem:[%s3] sm:$0x1]
      %v1218 = vperm.slane %v1216, 0
      %v1220 = vmul.f32 %v1167, %v1218
      %v1221 = vmul.f32 %v1169, %v1218
      %v1222 = vmul.f32 %v1172, %v1218
      %v1223 = vmul.f32 %v1174, %v1218
      %v1224 = vmul.f32 %v1177, %v1218
      %v1225 = vmul.f32 %v1179, %v1218
      %v1226 = vmul.f32 %v1182, %v1218
      %v1227 = vmul.f32 %v1184, %v1218
      %v1228 = vmul.f32 %v1187, %v1218
      %v1229 = vmul.f32 %v1189, %v1218
      %v1230 = vmul.f32 %v1192, %v1218
      %v1231 = vmul.f32 %v1194, %v1218
      %v1232 = vmul.f32 %v1197, %v1218
      %v1233 = vmul.f32 %v1199, %v1218
      %v1234 = vmul.f32 %v1202, %v1218
      %v1235 = vmul.f32 %v1204, %v1218
      %v1236 = vmul.f32 %v1207, %v1218
      %v1237 = vmul.f32 %v1209, %v1218
      %v1238 = vmul.f32 %v1212, %v1218
      %v1239 = vmul.f32 %v1214, %v1218
      %v1240 = vld [vmem:[%s4] sm:$0x1]
      %v1242 = vperm.slane %v1240, 0
      %v1244 = vadd.f32 %v1220, %v1242
      %v1245 = vadd.f32 %v1221, %v1242
      %v1246 = vadd.f32 %v1222, %v1242
      %v1247 = vadd.f32 %v1223, %v1242
      %v1248 = vadd.f32 %v1224, %v1242
      %v1249 = vadd.f32 %v1225, %v1242
      %v1250 = vadd.f32 %v1226, %v1242
      %v1251 = vadd.f32 %v1227, %v1242
      %v1252 = vadd.f32 %v1228, %v1242
      %v1253 = vadd.f32 %v1229, %v1242
      %v1254 = vadd.f32 %v1230, %v1242
      %v1255 = vadd.f32 %v1231, %v1242
      %v1256 = vadd.f32 %v1232, %v1242
      %v1257 = vadd.f32 %v1233, %v1242
      %v1258 = vadd.f32 %v1234, %v1242
      %v1259 = vadd.f32 %v1235, %v1242
      %v1260 = vadd.f32 %v1236, %v1242
      %v1261 = vadd.f32 %v1237, %v1242
      %v1262 = vadd.f32 %v1238, %v1242
      %v1263 = vadd.f32 %v1239, %v1242
      %v1264 = vmax.f32 %v1244, 0.0
      %v1265 = vmax.f32 %v1245, 0.0
      %v1266 = vmax.f32 %v1246, 0.0
      %v1267 = vmax.f32 %v1247, 0.0
      %v1268 = vmax.f32 %v1248, 0.0
      %v1269 = vmax.f32 %v1249, 0.0
      %v1270 = vmax.f32 %v1250, 0.0
      %v1271 = vmax.f32 %v1251, 0.0
      %v1272 = vmax.f32 %v1252, 0.0
      %v1273 = vmax.f32 %v1253, 0.0
      %v1274 = vmax.f32 %v1254, 0.0
      %v1275 = vmax.f32 %v1255, 0.0
      %v1276 = vmax.f32 %v1256, 0.0
      %v1277 = vmax.f32 %v1257, 0.0
      %v1278 = vmax.f32 %v1258, 0.0
      %v1279 = vmax.f32 %v1259, 0.0
      %v1280 = vmax.f32 %v1260, 0.0
      %v1281 = vmax.f32 %v1261, 0.0
      %v1282 = vmax.f32 %v1262, 0.0
      %v1283 = vmax.f32 %v1263, 0.0
      %s1284 = ssub.s32 %s305, 1
      %v1285 = vstv %s1284
      %v1286 = vadd.s32 %v1285, 1
      %v1287 = vadd.s32 %v1285, 2
      %v1288 = vadd.s32 %v1285, 3
      %v1289 = vadd.s32 %v1285, 4
      %v1290 = vadd.s32 %v1285, 5
      %v1291 = vadd.s32 %v1285, 6
      %v1292 = vadd.s32 %v1285, 7
      %v1293 = vadd.s32 %v1285, 8
      %v1294 = vadd.s32 %v1285, 9
      %vm1295 = vcmp.ge.s32.totalorder %v1285, 0
      %vm1296 = vcmp.ge.s32.totalorder %v1286, 0
      %vm1297 = vcmp.ge.s32.totalorder %v1287, 0
      %vm1298 = vcmp.ge.s32.totalorder %v1288, 0
      %vm1299 = vcmp.ge.s32.totalorder %v1289, 0
      %vm1300 = vcmp.ge.s32.totalorder %v1290, 0
      %vm1301 = vcmp.ge.s32.totalorder %v1291, 0
      %vm1302 = vcmp.ge.s32.totalorder %v1292, 0
      %vm1303 = vcmp.ge.s32.totalorder %v1293, 0
      %vm1304 = vcmp.ge.s32.totalorder %v1294, 0
      %vm1305 = vcmp.lt.s32.totalorder %v1285, 16
      %vm1306 = vcmp.lt.s32.totalorder %v1286, 16
      %vm1307 = vcmp.lt.s32.totalorder %v1287, 16
      %vm1308 = vcmp.lt.s32.totalorder %v1288, 16
      %vm1309 = vcmp.lt.s32.totalorder %v1289, 16
      %vm1310 = vcmp.lt.s32.totalorder %v1290, 16
      %vm1311 = vcmp.lt.s32.totalorder %v1291, 16
      %vm1312 = vcmp.lt.s32.totalorder %v1292, 16
      %vm1313 = vcmp.lt.s32.totalorder %v1293, 16
      %vm1314 = vcmp.lt.s32.totalorder %v1294, 16
      %vm1315 = vmand %vm1295, %vm1305
      %vm1316 = vmand %vm1296, %vm1306
      %vm1317 = vmand %vm1297, %vm1307
      %vm1318 = vmand %vm1298, %vm1308
      %vm1319 = vmand %vm1299, %vm1309
      %vm1320 = vmand %vm1300, %vm1310
      %vm1321 = vmand %vm1301, %vm1311
      %vm1322 = vmand %vm1302, %vm1312
      %vm1323 = vmand %vm1303, %vm1313
      %vm1324 = vmand %vm1304, %vm1314
      %v1325 = vsel %vm1315, 1, 0
      %v1326 = vsel %vm1316, 1, 0
      %v1327 = vsel %vm1317, 1, 0
      %v1328 = vsel %vm1318, 1, 0
      %v1329 = vsel %vm1319, 1, 0
      %v1330 = vsel %vm1320, 1, 0
      %v1331 = vsel %vm1321, 1, 0
      %v1332 = vsel %vm1322, 1, 0
      %v1333 = vsel %vm1323, 1, 0
      %v1334 = vsel %vm1324, 1, 0
      %v1335 = vcvt.s32.f32 %v1325
      %v1336 = vcvt.s32.f32 %v1326
      %v1337 = vcvt.s32.f32 %v1327
      %v1338 = vcvt.s32.f32 %v1328
      %v1339 = vcvt.s32.f32 %v1329
      %v1340 = vcvt.s32.f32 %v1330
      %v1341 = vcvt.s32.f32 %v1331
      %v1342 = vcvt.s32.f32 %v1332
      %v1343 = vcvt.s32.f32 %v1333
      %v1344 = vcvt.s32.f32 %v1334
      %v1345 = vmul.f32 %v1264, %v1335
      %v1346 = vmul.f32 %v1265, %v1335
      %v1347 = vmul.f32 %v1266, %v1336
      %v1348 = vmul.f32 %v1267, %v1336
      %v1349 = vmul.f32 %v1268, %v1337
      %v1350 = vmul.f32 %v1269, %v1337
      %v1351 = vmul.f32 %v1270, %v1338
      %v1352 = vmul.f32 %v1271, %v1338
      %v1353 = vmul.f32 %v1272, %v1339
      %v1354 = vmul.f32 %v1273, %v1339
      %v1355 = vmul.f32 %v1274, %v1340
      %v1356 = vmul.f32 %v1275, %v1340
      %v1357 = vmul.f32 %v1276, %v1341
      %v1358 = vmul.f32 %v1277, %v1341
      %v1359 = vmul.f32 %v1278, %v1342
      %v1360 = vmul.f32 %v1279, %v1342
      %v1361 = vmul.f32 %v1280, %v1343
      %v1362 = vmul.f32 %v1281, %v1343
      %v1363 = vmul.f32 %v1282, %v1344
      %v1364 = vmul.f32 %v1283, %v1344
      %v1365 = vpack.c.bf16 %v1345, %v1345
      %v1366 = vpack.c.bf16 %v1346, %v1346
      %v1367 = vpack.c.bf16 %v1347, %v1347
      %v1368 = vpack.c.bf16 %v1348, %v1348
      %v1369 = vpack.c.bf16 %v1349, %v1349
      %v1370 = vpack.c.bf16 %v1350, %v1350
      %v1371 = vpack.c.bf16 %v1351, %v1351
      %v1372 = vpack.c.bf16 %v1352, %v1352
      %v1373 = vpack.c.bf16 %v1353, %v1353
      %v1374 = vpack.c.bf16 %v1354, %v1354
      %v1375 = vpack.c.bf16 %v1355, %v1355
      %v1376 = vpack.c.bf16 %v1356, %v1356
      %v1377 = vpack.c.bf16 %v1357, %v1357
      %v1378 = vpack.c.bf16 %v1358, %v1358
      %v1379 = vpack.c.bf16 %v1359, %v1359
      %v1380 = vpack.c.bf16 %v1360, %v1360
      %v1381 = vpack.c.bf16 %v1361, %v1361
      %v1382 = vpack.c.bf16 %v1362, %v1362
      %v1383 = vpack.c.bf16 %v1363, %v1363
      %v1384 = vpack.c.bf16 %v1364, %v1364
      %v1405 = vunpack.c.l.b16 %v1365
      %v1406 = vunpack.c.l.b16 %v1366
      %v1407 = vunpack.c.l.b16 %v1367
      %v1408 = vunpack.c.l.b16 %v1368
      %v1409 = vunpack.c.l.b16 %v1369
      %v1410 = vunpack.c.l.b16 %v1370
      %v1411 = vunpack.c.l.b16 %v1371
      %v1412 = vunpack.c.l.b16 %v1372
      %v1413 = vunpack.c.l.b16 %v1373
      %v1414 = vunpack.c.l.b16 %v1374
      %v1415 = vunpack.c.l.b16 %v1375
      %v1416 = vunpack.c.l.b16 %v1376
      %v1417 = vunpack.c.l.b16 %v1377
      %v1418 = vunpack.c.l.b16 %v1378
      %v1419 = vunpack.c.l.b16 %v1379
      %v1420 = vunpack.c.l.b16 %v1380
      %v1421 = vunpack.c.l.b16 %v1381
      %v1422 = vunpack.c.l.b16 %v1382
      %v1423 = vunpack.c.l.b16 %v1383
      %v1424 = vunpack.c.l.b16 %v1384
      %v1425 = vpack.c.b16 %v1406, %v1405
      %v1426 = vpack.c.b16 %v1408, %v1407
      %v1427 = vpack.c.b16 %v1410, %v1409
      %v1428 = vpack.c.b16 %v1412, %v1411
      %v1429 = vpack.c.b16 %v1414, %v1413
      %v1430 = vpack.c.b16 %v1416, %v1415
      %v1431 = vpack.c.b16 %v1418, %v1417
      %v1432 = vpack.c.b16 %v1420, %v1419
      %v1433 = vpack.c.b16 %v1422, %v1421
      %v1434 = vpack.c.b16 %v1424, %v1423
      %v1436 = vshrl.u32 %v1425, 16
      %v1438 = vrot.slane %v1436, 7
      %v1439 = vshll.u32 %v1425, 16
      %v1441 = vor.u32 %v1438, %v1439
      %v1443 = vshrl.u32 %v1426, 16
      %v1445 = vrot.slane %v1443, 7
      %v1446 = vshll.u32 %v1426, 16
      %v1448 = vor.u32 %v1445, %v1446
      %v1450 = vshrl.u32 %v1427, 16
      %v1452 = vrot.slane %v1450, 7
      %v1453 = vshll.u32 %v1427, 16
      %v1455 = vor.u32 %v1452, %v1453
      %v1457 = vshrl.u32 %v1428, 16
      %v1459 = vrot.slane %v1457, 7
      %v1460 = vshll.u32 %v1428, 16
      %v1462 = vor.u32 %v1459, %v1460
      %v1464 = vshrl.u32 %v1429, 16
      %v1466 = vrot.slane %v1464, 7
      %v1467 = vshll.u32 %v1429, 16
      %v1469 = vor.u32 %v1466, %v1467
      %v1471 = vshrl.u32 %v1430, 16
      %v1473 = vrot.slane %v1471, 7
      %v1474 = vshll.u32 %v1430, 16
      %v1476 = vor.u32 %v1473, %v1474
      %v1478 = vshrl.u32 %v1431, 16
      %v1480 = vrot.slane %v1478, 7
      %v1481 = vshll.u32 %v1431, 16
      %v1483 = vor.u32 %v1480, %v1481
      %v1485 = vshrl.u32 %v1432, 16
      %v1487 = vrot.slane %v1485, 7
      %v1488 = vshll.u32 %v1432, 16
      %v1490 = vor.u32 %v1487, %v1488
      %v1492 = vshrl.u32 %v1433, 16
      %v1494 = vrot.slane %v1492, 7
      %v1495 = vshll.u32 %v1433, 16
      %v1497 = vor.u32 %v1494, %v1495
      %v1499 = vshrl.u32 %v1434, 16
      %v1501 = vrot.slane %v1499, 7
      %v1502 = vshll.u32 %v1434, 16
      %v1504 = vor.u32 %v1501, %v1502
      %v1525 = vsel %vm553, 0, %v1441
      %v1526 = vsel %vm553, 0, %v1448
      %v1527 = vsel %vm553, 0, %v1455
      %v1528 = vsel %vm553, 0, %v1462
      %v1529 = vsel %vm553, 0, %v1469
      %v1530 = vsel %vm553, 0, %v1476
      %v1531 = vsel %vm553, 0, %v1483
      %v1532 = vsel %vm553, 0, %v1490
      %v1533 = vsel %vm553, 0, %v1497
      %v1534 = vsel %vm553, 0, %v1504
      %v1535 = vsel %vm553, %v1438, 0
      %v1536 = vsel %vm553, %v1445, 0
      %v1537 = vsel %vm553, %v1452, 0
      %v1538 = vsel %vm553, %v1459, 0
      %v1539 = vsel %vm553, %v1466, 0
      %v1540 = vsel %vm553, %v1473, 0
      %v1541 = vsel %vm553, %v1480, 0
      %v1542 = vsel %vm553, %v1487, 0
      %v1543 = vsel %vm553, %v1494, 0
      %v1544 = vsel %vm553, %v1501, 0
      %v1546 = vshrl.u32 %v1525, 16
      %v1548 = vshll.u32 %v1525, 16
      %v1550 = vrot.slane %v1548, 1
      %v1551 = vor.u32 %v1546, %v1550
      %v1553 = vshll.u32 %v1535, 16
      %v1555 = vrot.slane %v1553, 1
      %v1556 = vsel %vm578, %v1551, %v1555
      %v1558 = vshrl.u32 %v1526, 16
      %v1560 = vshll.u32 %v1526, 16
      %v1562 = vrot.slane %v1560, 1
      %v1563 = vor.u32 %v1558, %v1562
      %v1565 = vshll.u32 %v1536, 16
      %v1567 = vrot.slane %v1565, 1
      %v1568 = vsel %vm578, %v1563, %v1567
      %v1570 = vshrl.u32 %v1527, 16
      %v1572 = vshll.u32 %v1527, 16
      %v1574 = vrot.slane %v1572, 1
      %v1575 = vor.u32 %v1570, %v1574
      %v1577 = vshll.u32 %v1537, 16
      %v1579 = vrot.slane %v1577, 1
      %v1580 = vsel %vm578, %v1575, %v1579
      %v1582 = vshrl.u32 %v1528, 16
      %v1584 = vshll.u32 %v1528, 16
      %v1586 = vrot.slane %v1584, 1
      %v1587 = vor.u32 %v1582, %v1586
      %v1589 = vshll.u32 %v1538, 16
      %v1591 = vrot.slane %v1589, 1
      %v1592 = vsel %vm578, %v1587, %v1591
      %v1594 = vshrl.u32 %v1529, 16
      %v1596 = vshll.u32 %v1529, 16
      %v1598 = vrot.slane %v1596, 1
      %v1599 = vor.u32 %v1594, %v1598
      %v1601 = vshll.u32 %v1539, 16
      %v1603 = vrot.slane %v1601, 1
      %v1604 = vsel %vm578, %v1599, %v1603
      %v1606 = vshrl.u32 %v1530, 16
      %v1608 = vshll.u32 %v1530, 16
      %v1610 = vrot.slane %v1608, 1
      %v1611 = vor.u32 %v1606, %v1610
      %v1613 = vshll.u32 %v1540, 16
      %v1615 = vrot.slane %v1613, 1
      %v1616 = vsel %vm578, %v1611, %v1615
      %v1618 = vshrl.u32 %v1531, 16
      %v1620 = vshll.u32 %v1531, 16
      %v1622 = vrot.slane %v1620, 1
      %v1623 = vor.u32 %v1618, %v1622
      %v1625 = vshll.u32 %v1541, 16
      %v1627 = vrot.slane %v1625, 1
      %v1628 = vsel %vm578, %v1623, %v1627
      %v1630 = vshrl.u32 %v1532, 16
      %v1632 = vshll.u32 %v1532, 16
      %v1634 = vrot.slane %v1632, 1
      %v1635 = vor.u32 %v1630, %v1634
      %v1637 = vshll.u32 %v1542, 16
      %v1639 = vrot.slane %v1637, 1
      %v1640 = vsel %vm578, %v1635, %v1639
      %1641 = vrot.lane.b32.xlu0 %v1556, 4
      %v1642 = vpop.permute.xlu0 %1641
      %1643 = vrot.lane.b32.xlu0 %v1568, 4
      %v1644 = vpop.permute.xlu0 %1643
      %1645 = vrot.lane.b32.xlu0 %v1580, 4
      %v1646 = vpop.permute.xlu0 %1645
      %1647 = vrot.lane.b32.xlu0 %v1592, 4
      %v1648 = vpop.permute.xlu0 %1647
      %1649 = vrot.lane.b32.xlu0 %v1604, 4
      %v1650 = vpop.permute.xlu0 %1649
      %1651 = vrot.lane.b32.xlu0 %v1616, 4
      %v1652 = vpop.permute.xlu0 %1651
      %1653 = vrot.lane.b32.xlu0 %v1628, 4
      %v1654 = vpop.permute.xlu0 %1653
      %1655 = vrot.lane.b32.xlu0 %v1640, 4
      %v1656 = vpop.permute.xlu0 %1655
      %v1673 = vrot.slane %v1525, 1
      %v1674 = vrot.slane %v1535, 1
      %v1675 = vsel %vm739, %v1673, %v1674
      %v1676 = vrot.slane %v1526, 1
      %v1677 = vrot.slane %v1536, 1
      %v1678 = vsel %vm739, %v1676, %v1677
      %v1679 = vrot.slane %v1527, 1
      %v1680 = vrot.slane %v1537, 1
      %v1681 = vsel %vm739, %v1679, %v1680
      %v1682 = vrot.slane %v1528, 1
      %v1683 = vrot.slane %v1538, 1
      %v1684 = vsel %vm739, %v1682, %v1683
      %v1685 = vrot.slane %v1529, 1
      %v1686 = vrot.slane %v1539, 1
      %v1687 = vsel %vm739, %v1685, %v1686
      %v1688 = vrot.slane %v1530, 1
      %v1689 = vrot.slane %v1540, 1
      %v1690 = vsel %vm739, %v1688, %v1689
      %v1691 = vrot.slane %v1531, 1
      %v1692 = vrot.slane %v1541, 1
      %v1693 = vsel %vm739, %v1691, %v1692
      %v1694 = vrot.slane %v1532, 1
      %v1695 = vrot.slane %v1542, 1
      %v1696 = vsel %vm739, %v1694, %v1695
      %1697 = vrot.lane.b32.xlu0 %v1675, 8
      %v1698 = vpop.permute.xlu0 %1697
      %1699 = vrot.lane.b32.xlu0 %v1678, 8
      %v1700 = vpop.permute.xlu0 %1699
      %1701 = vrot.lane.b32.xlu0 %v1681, 8
      %v1702 = vpop.permute.xlu0 %1701
      %1703 = vrot.lane.b32.xlu0 %v1684, 8
      %v1704 = vpop.permute.xlu0 %1703
      %1705 = vrot.lane.b32.xlu0 %v1687, 8
      %v1706 = vpop.permute.xlu0 %1705
      %1707 = vrot.lane.b32.xlu0 %v1690, 8
      %v1708 = vpop.permute.xlu0 %1707
      %1709 = vrot.lane.b32.xlu0 %v1693, 8
      %v1710 = vpop.permute.xlu0 %1709
      %1711 = vrot.lane.b32.xlu0 %v1696, 8
      %v1712 = vpop.permute.xlu0 %1711
      %1714 = vrot.lane.b32.xlu0 %v1526, 12
      %v1715 = vpop.permute.xlu0 %1714
      %1716 = vrot.lane.b32.xlu0 %v1527, 12
      %v1717 = vpop.permute.xlu0 %1716
      %1718 = vrot.lane.b32.xlu0 %v1528, 12
      %v1719 = vpop.permute.xlu0 %1718
      %1720 = vrot.lane.b32.xlu0 %v1529, 12
      %v1721 = vpop.permute.xlu0 %1720
      %1722 = vrot.lane.b32.xlu0 %v1530, 12
      %v1723 = vpop.permute.xlu0 %1722
      %1724 = vrot.lane.b32.xlu0 %v1531, 12
      %v1725 = vpop.permute.xlu0 %1724
      %1726 = vrot.lane.b32.xlu0 %v1532, 12
      %v1727 = vpop.permute.xlu0 %1726
      %1728 = vrot.lane.b32.xlu0 %v1533, 12
      %v1729 = vpop.permute.xlu0 %1728
      %v1731 = vshrl.u32 %v1533, 16
      %v1733 = vshll.u32 %v1533, 16
      %v1735 = vrot.slane %v1733, 1
      %v1736 = vor.u32 %v1731, %v1735
      %v1738 = vshll.u32 %v1543, 16
      %v1740 = vrot.slane %v1738, 1
      %v1741 = vsel %vm578, %v1736, %v1740
      %1742 = vrot.lane.b32.xlu0 %v1568, 16
      %v1743 = vpop.permute.xlu0 %1742
      %1744 = vrot.lane.b32.xlu0 %v1580, 16
      %v1745 = vpop.permute.xlu0 %1744
      %1746 = vrot.lane.b32.xlu0 %v1592, 16
      %v1747 = vpop.permute.xlu0 %1746
      %1748 = vrot.lane.b32.xlu0 %v1604, 16
      %v1749 = vpop.permute.xlu0 %1748
      %1750 = vrot.lane.b32.xlu0 %v1616, 16
      %v1751 = vpop.permute.xlu0 %1750
      %1752 = vrot.lane.b32.xlu0 %v1628, 16
      %v1753 = vpop.permute.xlu0 %1752
      %1754 = vrot.lane.b32.xlu0 %v1640, 16
      %v1755 = vpop.permute.xlu0 %1754
      %1756 = vrot.lane.b32.xlu0 %v1741, 16
      %v1757 = vpop.permute.xlu0 %1756
      %v1759 = vrot.slane %v1533, 1
      %v1760 = vrot.slane %v1543, 1
      %v1761 = vsel %vm739, %v1759, %v1760
      %1762 = vrot.lane.b32.xlu0 %v1678, 20
      %v1763 = vpop.permute.xlu0 %1762
      %1764 = vrot.lane.b32.xlu0 %v1681, 20
      %v1765 = vpop.permute.xlu0 %1764
      %1766 = vrot.lane.b32.xlu0 %v1684, 20
      %v1767 = vpop.permute.xlu0 %1766
      %1768 = vrot.lane.b32.xlu0 %v1687, 20
      %v1769 = vpop.permute.xlu0 %1768
      %1770 = vrot.lane.b32.xlu0 %v1690, 20
      %v1771 = vpop.permute.xlu0 %1770
      %1772 = vrot.lane.b32.xlu0 %v1693, 20
      %v1773 = vpop.permute.xlu0 %1772
      %1774 = vrot.lane.b32.xlu0 %v1696, 20
      %v1775 = vpop.permute.xlu0 %1774
      %1776 = vrot.lane.b32.xlu0 %v1761, 20
      %v1777 = vpop.permute.xlu0 %1776
      %1779 = vrot.lane.b32.xlu0 %v1527, 24
      %v1780 = vpop.permute.xlu0 %1779
      %1781 = vrot.lane.b32.xlu0 %v1528, 24
      %v1782 = vpop.permute.xlu0 %1781
      %1783 = vrot.lane.b32.xlu0 %v1529, 24
      %v1784 = vpop.permute.xlu0 %1783
      %1785 = vrot.lane.b32.xlu0 %v1530, 24
      %v1786 = vpop.permute.xlu0 %1785
      %1787 = vrot.lane.b32.xlu0 %v1531, 24
      %v1788 = vpop.permute.xlu0 %1787
      %1789 = vrot.lane.b32.xlu0 %v1532, 24
      %v1790 = vpop.permute.xlu0 %1789
      %1791 = vrot.lane.b32.xlu0 %v1533, 24
      %v1792 = vpop.permute.xlu0 %1791
      %1793 = vrot.lane.b32.xlu0 %v1534, 24
      %v1794 = vpop.permute.xlu0 %1793
      %v1796 = vshrl.u32 %v1534, 16
      %v1798 = vshll.u32 %v1534, 16
      %v1800 = vrot.slane %v1798, 1
      %v1801 = vor.u32 %v1796, %v1800
      %v1803 = vshll.u32 %v1544, 16
      %v1805 = vrot.slane %v1803, 1
      %v1806 = vsel %vm578, %v1801, %v1805
      %1807 = vrot.lane.b32.xlu0 %v1580, 28
      %v1808 = vpop.permute.xlu0 %1807
      %1809 = vrot.lane.b32.xlu0 %v1592, 28
      %v1810 = vpop.permute.xlu0 %1809
      %1811 = vrot.lane.b32.xlu0 %v1604, 28
      %v1812 = vpop.permute.xlu0 %1811
      %1813 = vrot.lane.b32.xlu0 %v1616, 28
      %v1814 = vpop.permute.xlu0 %1813
      %1815 = vrot.lane.b32.xlu0 %v1628, 28
      %v1816 = vpop.permute.xlu0 %1815
      %1817 = vrot.lane.b32.xlu0 %v1640, 28
      %v1818 = vpop.permute.xlu0 %1817
      %1819 = vrot.lane.b32.xlu0 %v1741, 28
      %v1820 = vpop.permute.xlu0 %1819
      %1821 = vrot.lane.b32.xlu0 %v1806, 28
      %v1822 = vpop.permute.xlu0 %1821
      %v1824 = vrot.slane %v1534, 1
      %v1825 = vrot.slane %v1544, 1
      %v1826 = vsel %vm739, %v1824, %v1825
      %1827 = vrot.lane.b32.xlu0 %v1681, 32
      %v1828 = vpop.permute.xlu0 %1827
      %1829 = vrot.lane.b32.xlu0 %v1684, 32
      %v1830 = vpop.permute.xlu0 %1829
      %1831 = vrot.lane.b32.xlu0 %v1687, 32
      %v1832 = vpop.permute.xlu0 %1831
      %1833 = vrot.lane.b32.xlu0 %v1690, 32
      %v1834 = vpop.permute.xlu0 %1833
      %1835 = vrot.lane.b32.xlu0 %v1693, 32
      %v1836 = vpop.permute.xlu0 %1835
      %1837 = vrot.lane.b32.xlu0 %v1696, 32
      %v1838 = vpop.permute.xlu0 %1837
      %1839 = vrot.lane.b32.xlu0 %v1761, 32
      %v1840 = vpop.permute.xlu0 %1839
      %1841 = vrot.lane.b32.xlu0 %v1826, 32
      %v1842 = vpop.permute.xlu0 %1841
      %v1844 = vsel %vm944, %v1525, %v1642
      %v1846 = vsel %vm944, %v1526, %v1644
      %v1848 = vsel %vm944, %v1527, %v1646
      %v1850 = vsel %vm944, %v1528, %v1648
      %v1852 = vsel %vm944, %v1529, %v1650
      %v1854 = vsel %vm944, %v1530, %v1652
      %v1856 = vsel %vm944, %v1531, %v1654
      %v1858 = vsel %vm944, %v1532, %v1656
      %v1860 = vsel %vm965, %v1844, %v1698
      %v1862 = vsel %vm965, %v1846, %v1700
      %v1864 = vsel %vm965, %v1848, %v1702
      %v1866 = vsel %vm965, %v1850, %v1704
      %v1868 = vsel %vm965, %v1852, %v1706
      %v1870 = vsel %vm965, %v1854, %v1708
      %v1872 = vsel %vm965, %v1856, %v1710
      %v1874 = vsel %vm965, %v1858, %v1712
      %v1876 = vsel %vm986, %v1860, %v1715
      %v1878 = vsel %vm986, %v1862, %v1717
      %v1880 = vsel %vm986, %v1864, %v1719
      %v1882 = vsel %vm986, %v1866, %v1721
      %v1884 = vsel %vm986, %v1868, %v1723
      %v1886 = vsel %vm986, %v1870, %v1725
      %v1888 = vsel %vm986, %v1872, %v1727
      %v1890 = vsel %vm986, %v1874, %v1729
      %v1892 = vsel %vm1007, %v1876, %v1743
      %v1894 = vsel %vm1007, %v1878, %v1745
      %v1896 = vsel %vm1007, %v1880, %v1747
      %v1898 = vsel %vm1007, %v1882, %v1749
      %v1900 = vsel %vm1007, %v1884, %v1751
      %v1902 = vsel %vm1007, %v1886, %v1753
      %v1904 = vsel %vm1007, %v1888, %v1755
      %v1906 = vsel %vm1007, %v1890, %v1757
      %v1908 = vsel %vm1028, %v1892, %v1763
      %v1910 = vsel %vm1028, %v1894, %v1765
      %v1912 = vsel %vm1028, %v1896, %v1767
      %v1914 = vsel %vm1028, %v1898, %v1769
      %v1916 = vsel %vm1028, %v1900, %v1771
      %v1918 = vsel %vm1028, %v1902, %v1773
      %v1920 = vsel %vm1028, %v1904, %v1775
      %v1922 = vsel %vm1028, %v1906, %v1777
      %v1924 = vsel %vm1049, %v1908, %v1780
      %v1926 = vsel %vm1049, %v1910, %v1782
      %v1928 = vsel %vm1049, %v1912, %v1784
      %v1930 = vsel %vm1049, %v1914, %v1786
      %v1932 = vsel %vm1049, %v1916, %v1788
      %v1934 = vsel %vm1049, %v1918, %v1790
      %v1936 = vsel %vm1049, %v1920, %v1792
      %v1938 = vsel %vm1049, %v1922, %v1794
      %v1940 = vsel %vm1070, %v1924, %v1808
      %v1942 = vsel %vm1070, %v1926, %v1810
      %v1944 = vsel %vm1070, %v1928, %v1812
      %v1946 = vsel %vm1070, %v1930, %v1814
      %v1948 = vsel %vm1070, %v1932, %v1816
      %v1950 = vsel %vm1070, %v1934, %v1818
      %v1952 = vsel %vm1070, %v1936, %v1820
      %v1954 = vsel %vm1070, %v1938, %v1822
      %v1956 = vsel %vm1091, %v1940, %v1828
      %v1958 = vsel %vm1091, %v1942, %v1830
      %v1960 = vsel %vm1091, %v1944, %v1832
      %v1962 = vsel %vm1091, %v1946, %v1834
      %v1964 = vsel %vm1091, %v1948, %v1836
      %v1966 = vsel %vm1091, %v1950, %v1838
      %v1968 = vsel %vm1091, %v1952, %v1840
      %v1970 = vsel %vm1091, %v1954, %v1842
      %v1971 = vld [vmem:[%s2] sm:$0xf]
      %v1972 = vld [vmem:[%s2 + $0x4] sm:$0xf]
      %v1973 = vld [vmem:[%s2 + $0x8] sm:$0xf]
      %v1974 = vld [vmem:[%s2 + $0xc] sm:$0xf]
      %v1975 = vld [vmem:[%s2 + $0x10] sm:$0x3]
      %v1981 = vunpack.c.l.b16 %v1971
      %v1982 = vunpack.c.l.b16 %v1972
      %v1983 = vunpack.c.l.b16 %v1973
      %v1984 = vunpack.c.l.b16 %v1974
      %v1985 = vunpack.c.l.b16 %v1975
      %v1986 = vpack.c.b16 %v1982, %v1981
      %v1987 = vpack.c.b16 %v1984, %v1983
      %v1988 = vpack.c.b16 %v1985, %v1985
      %v1991 = vsel %vm1132, %v1956, 0
      %v1993 = vsel %vm1132, %v1958, 0
      %v1995 = vsel %vm1132, %v1960, 0
      %v1997 = vsel %vm1132, %v1962, 0
      %v1999 = vsel %vm1132, %v1964, 0
      %v2001 = vsel %vm1132, %v1966, 0
      %v2003 = vsel %vm1132, %v1968, 0
      %v2005 = vsel %vm1132, %v1970, 0
      %v2008 = vsel %vm1153, %v1988, 0
      %2010 = vmatpush.bf16.msra.mxu0 0
      %2011 = vmatpush.bf16.msra.mxu0 0
      %2012 = vmatpush.bf16.msra.mxu0 0
      %2013 = vmatpush.bf16.msra.mxu0 0
      %2014 = vmatpush.bf16.msra.mxu0 0
      %2015 = vmatpush.bf16.msra.mxu0 %v2008
      %2016 = vmatpush.bf16.msra.mxu0 %v1987
      %2017 = vmatpush.bf16.msra.mxu0 %v1986
      %2018 = vmatmul.bf16.gmra.mxu0 %v1991
      %v2019 = vpop.f32.mrf.mxu0
      %v2020 = vadd.f32 0.0, %v2019
      %v2021 = vpop.f32.mrf.mxu0
      %v2022 = vadd.f32 0.0, %v2021
      %2023 = vmatmul.bf16.gmra.mxu0 %v1993
      %v2024 = vpop.f32.mrf.mxu0
      %v2025 = vadd.f32 0.0, %v2024
      %v2026 = vpop.f32.mrf.mxu0
      %v2027 = vadd.f32 0.0, %v2026
      %2028 = vmatmul.bf16.gmra.mxu0 %v1995
      %v2029 = vpop.f32.mrf.mxu0
      %v2030 = vadd.f32 0.0, %v2029
      %v2031 = vpop.f32.mrf.mxu0
      %v2032 = vadd.f32 0.0, %v2031
      %2033 = vmatmul.bf16.gmra.mxu0 %v1997
      %v2034 = vpop.f32.mrf.mxu0
      %v2035 = vadd.f32 0.0, %v2034
      %v2036 = vpop.f32.mrf.mxu0
      %v2037 = vadd.f32 0.0, %v2036
      %2038 = vmatmul.bf16.gmra.mxu0 %v1999
      %v2039 = vpop.f32.mrf.mxu0
      %v2040 = vadd.f32 0.0, %v2039
      %v2041 = vpop.f32.mrf.mxu0
      %v2042 = vadd.f32 0.0, %v2041
      %2043 = vmatmul.bf16.gmra.mxu0 %v2001
      %v2044 = vpop.f32.mrf.mxu0
      %v2045 = vadd.f32 0.0, %v2044
      %v2046 = vpop.f32.mrf.mxu0
      %v2047 = vadd.f32 0.0, %v2046
      %2048 = vmatmul.bf16.gmra.mxu0 %v2003
      %v2049 = vpop.f32.mrf.mxu0
      %v2050 = vadd.f32 0.0, %v2049
      %v2051 = vpop.f32.mrf.mxu0
      %v2052 = vadd.f32 0.0, %v2051
      %2053 = vmatmul.bf16.gmra.mxu0 %v2005
      %v2054 = vpop.f32.mrf.mxu0
      %v2055 = vadd.f32 0.0, %v2054
      %v2056 = vpop.f32.mrf.mxu0
      %v2057 = vadd.f32 0.0, %v2056
      %2058 = vdwg.mxu0
      %v2059 = vld [vmem:[%s5] sm:$0x1]
      %v2061 = vperm.slane %v2059, 0
      %v2063 = vmul.f32 %v2020, %v2061
      %v2064 = vmul.f32 %v2022, %v2061
      %v2065 = vmul.f32 %v2025, %v2061
      %v2066 = vmul.f32 %v2027, %v2061
      %v2067 = vmul.f32 %v2030, %v2061
      %v2068 = vmul.f32 %v2032, %v2061
      %v2069 = vmul.f32 %v2035, %v2061
      %v2070 = vmul.f32 %v2037, %v2061
      %v2071 = vmul.f32 %v2040, %v2061
      %v2072 = vmul.f32 %v2042, %v2061
      %v2073 = vmul.f32 %v2045, %v2061
      %v2074 = vmul.f32 %v2047, %v2061
      %v2075 = vmul.f32 %v2050, %v2061
      %v2076 = vmul.f32 %v2052, %v2061
      %v2077 = vmul.f32 %v2055, %v2061
      %v2078 = vmul.f32 %v2057, %v2061
      %v2079 = vld [vmem:[%s6] sm:$0x1]
      %v2081 = vperm.slane %v2079, 0
      %v2083 = vadd.f32 %v2063, %v2081
      %v2084 = vadd.f32 %v2064, %v2081
      %v2085 = vadd.f32 %v2065, %v2081
      %v2086 = vadd.f32 %v2066, %v2081
      %v2087 = vadd.f32 %v2067, %v2081
      %v2088 = vadd.f32 %v2068, %v2081
      %v2089 = vadd.f32 %v2069, %v2081
      %v2090 = vadd.f32 %v2070, %v2081
      %v2091 = vadd.f32 %v2071, %v2081
      %v2092 = vadd.f32 %v2072, %v2081
      %v2093 = vadd.f32 %v2073, %v2081
      %v2094 = vadd.f32 %v2074, %v2081
      %v2095 = vadd.f32 %v2075, %v2081
      %v2096 = vadd.f32 %v2076, %v2081
      %v2097 = vadd.f32 %v2077, %v2081
      %v2098 = vadd.f32 %v2078, %v2081
      %v2099 = vadd.f32 %v2083, %v308
      %v2100 = vadd.f32 %v2084, %v309
      %v2101 = vadd.f32 %v2085, %v310
      %v2102 = vadd.f32 %v2086, %v311
      %v2103 = vadd.f32 %v2087, %v312
      %v2104 = vadd.f32 %v2088, %v313
      %v2105 = vadd.f32 %v2089, %v314
      %v2106 = vadd.f32 %v2090, %v315
      %v2107 = vadd.f32 %v2091, %v316
      %v2108 = vadd.f32 %v2092, %v317
      %v2109 = vadd.f32 %v2093, %v318
      %v2110 = vadd.f32 %v2094, %v319
      %v2111 = vadd.f32 %v2095, %v320
      %v2112 = vadd.f32 %v2096, %v321
      %v2113 = vadd.f32 %v2097, %v322
      %v2114 = vadd.f32 %v2098, %v323
      %v2115 = vmax.f32 %v2099, 0.0
      %v2116 = vmax.f32 %v2100, 0.0
      %v2117 = vmax.f32 %v2101, 0.0
      %v2118 = vmax.f32 %v2102, 0.0
      %v2119 = vmax.f32 %v2103, 0.0
      %v2120 = vmax.f32 %v2104, 0.0
      %v2121 = vmax.f32 %v2105, 0.0
      %v2122 = vmax.f32 %v2106, 0.0
      %v2123 = vmax.f32 %v2107, 0.0
      %v2124 = vmax.f32 %v2108, 0.0
      %v2125 = vmax.f32 %v2109, 0.0
      %v2126 = vmax.f32 %v2110, 0.0
      %v2127 = vmax.f32 %v2111, 0.0
      %v2128 = vmax.f32 %v2112, 0.0
      %v2129 = vmax.f32 %v2113, 0.0
      %v2130 = vmax.f32 %v2114, 0.0
      %2131 = vst.msk [vmem:[%s302] sm:$0xff] %vm944, %v2115
      %2132 = vst.msk [vmem:[%s302 + $0x8] sm:$0xff] %vm944, %v2116
      %2133 = vst.msk [vmem:[%s302 + $0x10] sm:$0xff] %vm944, %v2117
      %2134 = vst.msk [vmem:[%s302 + $0x18] sm:$0xff] %vm944, %v2118
      %2135 = vst.msk [vmem:[%s302 + $0x20] sm:$0xff] %vm944, %v2119
      %2136 = vst.msk [vmem:[%s302 + $0x28] sm:$0xff] %vm944, %v2120
      %2137 = vst.msk [vmem:[%s302 + $0x30] sm:$0xff] %vm944, %v2121
      %2138 = vst.msk [vmem:[%s302 + $0x38] sm:$0xff] %vm944, %v2122
      %2139 = vst.msk [vmem:[%s302 + $0x40] sm:$0xff] %vm944, %v2123
      %2140 = vst.msk [vmem:[%s302 + $0x48] sm:$0xff] %vm944, %v2124
      %2141 = vst.msk [vmem:[%s302 + $0x50] sm:$0xff] %vm944, %v2125
      %2142 = vst.msk [vmem:[%s302 + $0x58] sm:$0xff] %vm944, %v2126
      %2143 = vst.msk [vmem:[%s302 + $0x60] sm:$0xff] %vm944, %v2127
      %2144 = vst.msk [vmem:[%s302 + $0x68] sm:$0xff] %vm944, %v2128
      %2145 = vst.msk [vmem:[%s302 + $0x70] sm:$0xff] %vm944, %v2129
      %2146 = vst.msk [vmem:[%s302 + $0x78] sm:$0xff] %vm944, %v2130
      %s2147 = smul.u32 8, %s23
      %p2148 = scmp.lt.s32.totalorder %s22, 1
      %s2149 = scalar_select %p2148, %s22, 1
      %p2150 = scmp.lt.s32.totalorder %s2147, 15
      %s2151 = scalar_select %p2150, %s2147, 15
      %s2152 = smul.addr %s2151, 2
      %s2153 = smul.addr %s2149, 32
      %s2154 = sadd.s32 %s2152, %s2153
      %s2155 = smul.addr %s2154, 8
      %s2156 = scalar_lea.vmem %s7, %s2155
      // Predicated region
      $region49: #{basic_block_forward.1} parent=47 // pred_check
        %p2157 = pneg %p202
      $region50: #{basic_block_forward.1} parent=47 // pred_check_branch
        %2159 = sbr.rel (%p2157) target = $region52
      $region51: #{basic_block_forward.1} parent=47 // pred_region
        %s2160 = smul.u32 8, %s23
      $region52: #{basic_block_forward.1} parent=47 // pred_fallthru
        _
    $region48: #{basic_block_forward.1} parent=5 // pred_fallthru
      _
    %p2161 = scmp.le.s32.totalorder 2, %s13
    // Predicated region
    $region53: #{basic_block_forward.1} parent=5 // pred_check
      %p2162 = pneg %p2161
    $region54: #{basic_block_forward.1} parent=5 // pred_check_branch
      %2164 = sbr.rel (%p2162) target = $region56
    $region55: #{basic_block_forward.1} parent=5 // pred_region
      %s2165 = ssub.s32 %s13, 2
      // Predicated region
      $region57: #{basic_block_forward.1} parent=55 // pred_check
        %p2166 = pneg %p208
      $region58: #{basic_block_forward.1} parent=55 // pred_check_branch
        %2168 = sbr.rel (%p2166) target = $region60
      $region59: #{basic_block_forward.1} parent=55 // pred_region
        %s2169 = smul.u32 8, %s25
        %p2170 = scmp.lt.s32.totalorder %s24, 1
        %s2171 = scalar_select %p2170, %s24, 1
        %p2172 = scmp.lt.s32.totalorder %s2169, 15
        %s2173 = scalar_select %p2172, %s2169, 15
        %s2174 = smul.addr %s2173, 2
        %s2175 = smul.addr %s2171, 32
        %s2176 = sadd.s32 %s2174, %s2175
        %s2177 = smul.addr %s2176, 8
        %s2178 = scalar_lea.vmem %s7, %s2177
      $region60: #{basic_block_forward.1} parent=55 // pred_fallthru
        _
    $region56: #{basic_block_forward.1} parent=5 // pred_fallthru
      _
  $region6: #{basic_block_forward.1} parent=0 // loop_footer
    %s17 = sadd.s32 1, %s13
  $region7: #{basic_block_forward.1} parent=0 // loop_footer_branch
    %12 = sbr.rel target = $region3
  $region8: #{basic_block_forward.1} parent=0 // loop_exit
    _

</llo_original>
